<compile_context>
chip_gen: v7x
topology: tpu7x:2x2x1
jax: 0.10.0
libtpu: 0.0.40
codegen_flags: <defaults>
</compile_context>

<pallas_src>
import numpy as np
import jax
import jax.numpy as jnp
from jax.experimental import pallas as pl
from jax.experimental.pallas import tpu as pltpu

INPUT_SIZE = 13
HIDDEN_SIZE = 64
OUTPUT_SIZE = 13          # forward indexes lstm_layers[i] for i in range(x.size(1))
BATCH = 2

L = OUTPUT_SIZE
IN = INPUT_SIZE
H = HIDDEN_SIZE
HP = 896                  # padded per-gate width: 7*128 >= L*H = 832
OUT_PAD = 128             # lane-dense output width (>= L, multiple of 128)


def _music_lstm_kernel(x_ref, wg_ref, bg_ref, wl_ref, bl_ref, out_ref):
    # x_ref  : (B, L*IN)      = (2, 169)
    # wg_ref : (L*IN, 3*HP)   = (169, 2688)  block-diag [i | g | o] gate weights
    # bg_ref : (1, 3*HP)
    # wl_ref : (HP, OUT_PAD)  = (896, 128)   block-diag per-channel linear (padded)
    # bl_ref : (1, OUT_PAD)
    # out_ref: (B, OUT_PAD)   = (2, 128)     lane-dense; cols [0:L] are valid
    x = x_ref[...]
    gates = jnp.dot(x, wg_ref[...], preferred_element_type=jnp.float32) + bg_ref[...]

    i_act = jax.nn.sigmoid(gates[:, 0 * HP:1 * HP])   # (B, HP)
    g_act = jnp.tanh(gates[:, 1 * HP:2 * HP])
    o_act = jax.nn.sigmoid(gates[:, 2 * HP:3 * HP])

    # h0 = c0 = 0, seq len 1  =>  c = i*g ; h = o*tanh(c).
    # Padded lanes (zero weight, zero bias) give h == 0 and hit zero rows of wl.
    c = i_act * g_act
    h = o_act * jnp.tanh(c)                            # (B, HP)

    y = jnp.dot(h, wl_ref[...], preferred_element_type=jnp.float32) + bl_ref[...]
    out_ref[...] = jax.nn.sigmoid(y).astype(out_ref.dtype)   # (B, OUT_PAD)


def music_lstm_forward(x, params):
    """x: (B, L, IN) float32 -> (B, L) float32."""
    B, Lx, INx = x.shape
    assert Lx == L and INx == IN
    x2d = x.reshape(B, L * IN)                         # contiguous reshape, free

    vmem_spec = pl.BlockSpec(memory_space=pltpu.MemorySpace.VMEM)
    out_padded = pl.pallas_call(
        _music_lstm_kernel,
        out_shape=jax.ShapeDtypeStruct((B, OUT_PAD), jnp.float32),
        in_specs=[vmem_spec] * 5,
        out_specs=vmem_spec,
    )(x2d, params["wg"], params["bg"], params["wl"], params["bl"])
    return out_padded[:, :L]


def init_params(key):
    """Deterministic init mimicking PyTorch uniform(-1/sqrt(H), 1/sqrt(H)),
    then repacked into fused block-diagonal tensors for the kernel."""
    bound = 1.0 / np.sqrt(H)
    ks = jax.random.split(key, 5)
    W_ih = jax.random.uniform(ks[0], (L, 4 * H, IN), jnp.float32, -bound, bound)
    b_ih = jax.random.uniform(ks[1], (L, 4 * H), jnp.float32, -bound, bound)
    b_hh = jax.random.uniform(ks[2], (L, 4 * H), jnp.float32, -bound, bound)
    W_lin = jax.random.uniform(ks[3], (L, 1, H), jnp.float32, -bound, bound)
    b_lin = jax.random.uniform(ks[4], (L, 1), jnp.float32, -bound, bound)

    W_ih_np = np.asarray(W_ih)                  # (L, 4H, IN)
    b_np = np.asarray(b_ih + b_hh)              # (L, 4H)  (h0=0 => biases just add)
    W_lin_np = np.asarray(W_lin)                # (L, 1, H)
    b_lin_np = np.asarray(b_lin)                # (L, 1)

    # PyTorch gate order within 4H: i [0:H], f [H:2H], g [2H:3H], o [3H:4H].
    gate_slices = [slice(0, H), slice(2 * H, 3 * H), slice(3 * H, 4 * H)]  # i, g, o

    Wg = np.zeros((L * IN, 3 * HP), np.float32)
    bg = np.zeros((1, 3 * HP), np.float32)
    for c in range(L):
        for gidx, gsl in enumerate(gate_slices):
            col0 = gidx * HP + c * H
            Wg[c * IN:(c + 1) * IN, col0:col0 + H] = W_ih_np[c, gsl, :].T
            bg[0, col0:col0 + H] = b_np[c, gsl]

    Wl = np.zeros((HP, OUT_PAD), np.float32)
    bl = np.zeros((1, OUT_PAD), np.float32)
    for c in range(L):
        Wl[c * H:(c + 1) * H, c] = W_lin_np[c, 0, :]
        bl[0, c] = b_lin_np[c, 0]

    params = {
        "wg": jnp.asarray(Wg),     # (169, 2688)
        "bg": jnp.asarray(bg),     # (1, 2688)
        "wl": jnp.asarray(Wl),     # (896, 128)
        "bl": jnp.asarray(bl),     # (1, 128)
    }
    raw = (W_ih, b_ih, b_hh, W_lin, b_lin)
    return params, raw


def ref_forward(x, raw):
    """Pure-JAX replica of the PyTorch forward (gate order i, f, g, o; h0=c0=0)."""
    W_ih, b_ih, b_hh, W_lin, b_lin = raw
    outs = []
    for i in range(x.shape[1]):
        xi = x[:, i, :]                                   # (B, IN)
        gates = xi @ W_ih[i].T + b_ih[i] + b_hh[i]        # (B, 4H)
        i_g = jax.nn.sigmoid(gates[:, 0 * H:1 * H])
        g_g = jnp.tanh(gates[:, 2 * H:3 * H])
        o_g = jax.nn.sigmoid(gates[:, 3 * H:4 * H])
        c = i_g * g_g
        h = o_g * jnp.tanh(c)
        y = jax.nn.sigmoid(h @ W_lin[i].T + b_lin[i])     # (B, 1)
        outs.append(y)
    return jnp.concatenate(outs, axis=1)                  # (B, L)


if __name__ == "__main__":
    key = jax.random.PRNGKey(0)
    k_x, k_p = jax.random.split(key)

    x = jax.random.normal(k_x, (BATCH, OUTPUT_SIZE, INPUT_SIZE), dtype=jnp.float32)
    params, raw = init_params(k_p)

    out = music_lstm_forward(x, params)
    out = jax.block_until_ready(out)

    ref = jax.block_until_ready(ref_forward(x, raw))
    np.testing.assert_allclose(np.asarray(out), np.asarray(ref), rtol=1e-5, atol=1e-5)
    assert out.shape == (BATCH, OUTPUT_SIZE)

    print("KERNEL_OK")
</pallas_src>

<mosaic_0001>
module attributes {stable_mosaic.version = 11 : i64} {
  func.func @_music_lstm_kernel(%arg0: memref<2x169xf32, #tpu.memory_space<vmem>>, %arg1: memref<169x2688xf32, #tpu.memory_space<vmem>>, %arg2: memref<1x2688xf32, #tpu.memory_space<vmem>>, %arg3: memref<896x128xf32, #tpu.memory_space<vmem>>, %arg4: memref<1x128xf32, #tpu.memory_space<vmem>>, %arg5: memref<2x128xf32, #tpu.memory_space<vmem>>) attributes {dimension_semantics = [], scalar_prefetch = 0 : i64, scratch_operands = 0 : i64, tpu.core_type = #tpu.core_type<tc>} {
    %c0 = arith.constant 0 : index
    %c0_0 = arith.constant 0 : index
    %0 = vector.load %arg0[%c0, %c0_0] : memref<2x169xf32, #tpu.memory_space<vmem>>, vector<2x169xf32>
    %c0_1 = arith.constant 0 : index
    %c0_2 = arith.constant 0 : index
    %1 = vector.load %arg1[%c0_1, %c0_2] : memref<169x2688xf32, #tpu.memory_space<vmem>>, vector<169x2688xf32>
    %cst = arith.constant dense<0.000000e+00> : vector<2x2688xf32>
    %2 = tpu.matmul %0, %1, %cst {dimension_numbers = #tpu.dot_dimension_numbers<[1], [0], [0], [1], [0, 0, 1, 1], [], []>} : vector<2x169xf32>, vector<169x2688xf32>, vector<2x2688xf32> -> vector<2x2688xf32>
    %c0_3 = arith.constant 0 : index
    %c0_4 = arith.constant 0 : index
    %3 = vector.load %arg2[%c0_3, %c0_4] : memref<1x2688xf32, #tpu.memory_space<vmem>>, vector<1x2688xf32>
    %4 = vector.broadcast %3 : vector<1x2688xf32> to vector<2x2688xf32>
    %5 = arith.addf %2, %4 : vector<2x2688xf32>
    %6 = vector.extract_strided_slice %5 {offsets = [0, 0], sizes = [2, 896], strides = [1, 1]} : vector<2x2688xf32> to vector<2x896xf32>
    %7 = arith.negf %6 : vector<2x896xf32>
    %8 = math.exp %7 : vector<2x896xf32>
    %cst_5 = arith.constant 1.000000e+00 : f32
    %9 = vector.broadcast %cst_5 : f32 to vector<2x896xf32>
    %10 = arith.addf %9, %8 : vector<2x896xf32>
    %11 = arith.divf %9, %10 : vector<2x896xf32>
    %12 = vector.extract_strided_slice %5 {offsets = [0, 896], sizes = [2, 896], strides = [1, 1]} : vector<2x2688xf32> to vector<2x896xf32>
    %13 = math.tanh %12 : vector<2x896xf32>
    %14 = vector.extract_strided_slice %5 {offsets = [0, 1792], sizes = [2, 896], strides = [1, 1]} : vector<2x2688xf32> to vector<2x896xf32>
    %15 = arith.negf %14 : vector<2x896xf32>
    %16 = math.exp %15 : vector<2x896xf32>
    %cst_6 = arith.constant 1.000000e+00 : f32
    %17 = vector.broadcast %cst_6 : f32 to vector<2x896xf32>
    %18 = arith.addf %17, %16 : vector<2x896xf32>
    %19 = arith.divf %17, %18 : vector<2x896xf32>
    %20 = arith.mulf %11, %13 : vector<2x896xf32>
    %21 = math.tanh %20 : vector<2x896xf32>
    %22 = arith.mulf %19, %21 : vector<2x896xf32>
    %c0_7 = arith.constant 0 : index
    %c0_8 = arith.constant 0 : index
    %23 = vector.load %arg3[%c0_7, %c0_8] : memref<896x128xf32, #tpu.memory_space<vmem>>, vector<896x128xf32>
    %cst_9 = arith.constant dense<0.000000e+00> : vector<2x128xf32>
    %24 = tpu.matmul %22, %23, %cst_9 {dimension_numbers = #tpu.dot_dimension_numbers<[1], [0], [0], [1], [0, 0, 1, 1], [], []>} : vector<2x896xf32>, vector<896x128xf32>, vector<2x128xf32> -> vector<2x128xf32>
    %c0_10 = arith.constant 0 : index
    %c0_11 = arith.constant 0 : index
    %25 = vector.load %arg4[%c0_10, %c0_11] : memref<1x128xf32, #tpu.memory_space<vmem>>, vector<1x128xf32>
    %26 = vector.broadcast %25 : vector<1x128xf32> to vector<2x128xf32>
    %27 = arith.addf %24, %26 : vector<2x128xf32>
    %28 = arith.negf %27 : vector<2x128xf32>
    %29 = math.exp %28 : vector<2x128xf32>
    %cst_12 = arith.constant 1.000000e+00 : f32
    %30 = vector.broadcast %cst_12 : f32 to vector<2x128xf32>
    %31 = arith.addf %30, %29 : vector<2x128xf32>
    %32 = arith.divf %30, %31 : vector<2x128xf32>
    %c0_13 = arith.constant 0 : index
    %c0_14 = arith.constant 0 : index
    %33 = vector.load %arg5[%c0_13, %c0_14] : memref<2x128xf32, #tpu.memory_space<vmem>>, vector<2x128xf32>
    tpu.vector_store %arg5[%c0_13, %c0_14], %32 {strides = array<i32>} : memref<2x128xf32, #tpu.memory_space<vmem>>, vector<2x128xf32>,
    return
  }
}

</mosaic_0001>

<llo_original>
// kernel: tpu_custom_call.1
$region0: #{tpu_custom_call.1}
  #allocation0 [shape = 'u32[]', space=smem, size = 0x4, offset = 0x4, fixed_abs, tag = 'smem constant byte address 0x4 - core index']
  #allocation1 [shape = 'u32[144,128]{1,0:T(1,128)}', space=vmem, size = 0x12000, scoped, tag = 'internal scratch']
  %s0 = inlined_call_operand.hbm [shape: f32[2,169], index: 0, kind: input, shape index: {}]
  %s1 = inlined_call_operand.hbm [shape: f32[169,2688], index: 1, kind: input, shape index: {}]
  %s2 = inlined_call_operand.hbm [shape: f32[1,2688], index: 2, kind: input, shape index: {}]
  %s3 = inlined_call_operand.hbm [shape: f32[896,128], index: 3, kind: input, shape index: {}]
  %s4 = inlined_call_operand.hbm [shape: f32[1,128], index: 4, kind: input, shape index: {}]
  %s5 = inlined_call_operand.hbm [shape: f32[2,128], index: 5, kind: output, shape index: {}]
  %s6 = sld [smem:[#allocation0]]
  $region50: #{tpu_custom_call.1} parent=0
    _
  %s8 = ssub.s32 1, %s6
  %s9 = scalar_select 0, %s8, %s6
  $region1: #{tpu_custom_call.1} parent=0
    #allocation2 [shape = 'u8[2048]{0}', space=vmem, size = 0x800, scoped, tag = 'input window, operand 0, single buffered']
    #allocation3 [shape = 's32[1]{0}', space=sflag, size = 0x4, scoped, tag = 'scoped memory for tpu_custom_call.1']
    #allocation4 [shape = 's32[1]{0}', space=sflag, size = 0x4, scoped, tag = 'scoped memory for tpu_custom_call.1']
    #allocation5 [shape = 'u8[1892352]{0}', space=vmem, size = 0x1ce000, scoped, tag = 'input window, operand 1, single buffered']
    #allocation6 [shape = 's32[1]{0}', space=sflag, size = 0x4, scoped, tag = 'scoped memory for tpu_custom_call.1']
    #allocation7 [shape = 'u8[10752]{0}', space=vmem, size = 0x2c00, scoped, tag = 'input window, operand 2, single buffered']
    #allocation8 [shape = 'u8[458752]{0}', space=vmem, size = 0x70000, scoped, tag = 'input window, operand 3, single buffered']
    #allocation9 [shape = 's32[1]{0}', space=sflag, size = 0x4, scoped, tag = 'scoped memory for tpu_custom_call.1']
    #allocation10 [shape = 'u8[512]{0}', space=vmem, size = 0x400, scoped, tag = 'input window, operand 4, single buffered']
    #allocation11 [shape = 'u8[1024]{0}', space=vmem, size = 0x400, scoped, tag = 'output window, operand 0, single buffered']
    %10 = vsyncpa [#allocation3], 0
    %11 = vsyncpa [#allocation6], 0
    %12 = vsyncpa [#allocation9], 0
    %13 = vsyncpa [#allocation4], 0
    // Predicated region
    $region2: #{tpu_custom_call.1} parent=1 // pred_check
      _
    $region3: #{tpu_custom_call.1} parent=1 // pred_check_branch
      %15 = sbr.rel (0) target = $region5
    $region4: #{tpu_custom_call.1} parent=1 // pred_region
      %s17 = ssub.s32 64, 64
      %18 = vsyncadd [#allocation3], %s17
      %s20 = sshll.u32 [#allocation2], 4
      %s21 = int_to_ptr.vmem [resolvable:$true] %s20
      %23 = dma.hbm_to_vmem [thread:$0]  %s0, 64, %s21, [#allocation3]
    $region5: #{tpu_custom_call.1} parent=1 // pred_fallthru
      _
    // Predicated region
    $region6: #{tpu_custom_call.1} parent=1 // pred_check
      _
    $region7: #{tpu_custom_call.1} parent=1 // pred_check_branch
      %25 = sbr.rel (0) target = $region9
    $region8: #{tpu_custom_call.1} parent=1 // pred_region
      %s27 = ssub.s32 59136, 59136
      %28 = vsyncadd [#allocation6], %s27
      %s29 = sshll.u32 [#allocation5], 4
      %s30 = int_to_ptr.vmem [resolvable:$true] %s29
      %35 = dma.hbm_to_vmem [thread:$0]  %s1, 59136, %s30, [#allocation6], 2688, 2688, 168
    $region9: #{tpu_custom_call.1} parent=1 // pred_fallthru
      _
    // Predicated region
    $region10: #{tpu_custom_call.1} parent=1 // pred_check
      _
    $region11: #{tpu_custom_call.1} parent=1 // pred_check_branch
      %37 = sbr.rel (0) target = $region13
    $region12: #{tpu_custom_call.1} parent=1 // pred_region
      %s39 = ssub.s32 336, 336
      %40 = vsyncadd [#allocation6], %s39
      %s42 = sshll.u32 [#allocation7], 4
      %s43 = int_to_ptr.vmem [resolvable:$true] %s42
      %45 = dma.hbm_to_vmem [thread:$0]  %s2, 336, %s43, [#allocation6]
    $region13: #{tpu_custom_call.1} parent=1 // pred_fallthru
      _
    // Predicated region
    $region14: #{tpu_custom_call.1} parent=1 // pred_check
      _
    $region15: #{tpu_custom_call.1} parent=1 // pred_check_branch
      %47 = sbr.rel (0) target = $region17
    $region16: #{tpu_custom_call.1} parent=1 // pred_region
      %s49 = ssub.s32 14336, 14336
      %50 = vsyncadd [#allocation9], %s49
      %s51 = sshll.u32 [#allocation8], 4
      %s52 = int_to_ptr.vmem [resolvable:$true] %s51
      %57 = dma.hbm_to_vmem [thread:$0]  %s3, 14336, %s52, [#allocation9], 128, 128, 8
    $region17: #{tpu_custom_call.1} parent=1 // pred_fallthru
      _
    // Predicated region
    $region18: #{tpu_custom_call.1} parent=1 // pred_check
      _
    $region19: #{tpu_custom_call.1} parent=1 // pred_check_branch
      %59 = sbr.rel (0) target = $region21
    $region20: #{tpu_custom_call.1} parent=1 // pred_region
      %s61 = ssub.s32 16, 16
      %62 = vsyncadd [#allocation9], %s61
      %s64 = sshll.u32 [#allocation10], 4
      %s65 = int_to_ptr.vmem [resolvable:$true] %s64
      %67 = dma.hbm_to_vmem [thread:$0]  %s4, 16, %s65, [#allocation9]
    $region21: #{tpu_custom_call.1} parent=1 // pred_fallthru
      _
    // Predicated region
    $region22: #{tpu_custom_call.1} parent=1 // pred_check
      _
    $region23: #{tpu_custom_call.1} parent=1 // pred_check_branch
      %69 = sbr.rel (0) target = $region25
    $region24: #{tpu_custom_call.1} parent=1 // pred_region
      %70 = dma.done [#allocation3], 64
    $region25: #{tpu_custom_call.1} parent=1 // pred_fallthru
      _
    // Predicated region
    $region26: #{tpu_custom_call.1} parent=1 // pred_check
      _
    $region27: #{tpu_custom_call.1} parent=1 // pred_check_branch
      %72 = sbr.rel (0) target = $region29
    $region28: #{tpu_custom_call.1} parent=1 // pred_region
      %73 = dma.done [#allocation6], 59136
    $region29: #{tpu_custom_call.1} parent=1 // pred_fallthru
      _
    // Predicated region
    $region30: #{tpu_custom_call.1} parent=1 // pred_check
      _
    $region31: #{tpu_custom_call.1} parent=1 // pred_check_branch
      %75 = sbr.rel (0) target = $region33
    $region32: #{tpu_custom_call.1} parent=1 // pred_region
      %76 = dma.done [#allocation6], 336
    $region33: #{tpu_custom_call.1} parent=1 // pred_fallthru
      _
    // Predicated region
    $region34: #{tpu_custom_call.1} parent=1 // pred_check
      _
    $region35: #{tpu_custom_call.1} parent=1 // pred_check_branch
      %78 = sbr.rel (0) target = $region37
    $region36: #{tpu_custom_call.1} parent=1 // pred_region
      %79 = dma.done [#allocation9], 14336
    $region37: #{tpu_custom_call.1} parent=1 // pred_fallthru
      _
    // Predicated region
    $region38: #{tpu_custom_call.1} parent=1 // pred_check
      _
    $region39: #{tpu_custom_call.1} parent=1 // pred_check_branch
      %81 = sbr.rel (0) target = $region41
    $region40: #{tpu_custom_call.1} parent=1 // pred_region
      %82 = dma.done [#allocation9], 16
    $region41: #{tpu_custom_call.1} parent=1 // pred_fallthru
      _
    %v83 = vld [vmem:[#allocation2] sm:$0xf]
    %v84 = vld [vmem:[#allocation5] sm:$0xff]
    %v85 = vld [vmem:[#allocation5 + $0x8] sm:$0xff]
    %v86 = vld [vmem:[#allocation5 + $0x10] sm:$0xff]
    %v87 = vld [vmem:[#allocation5 + $0x18] sm:$0xff]
    %v88 = vld [vmem:[#allocation5 + $0x20] sm:$0xff]
    %v89 = vld [vmem:[#allocation5 + $0x28] sm:$0xff]
    %v90 = vld [vmem:[#allocation5 + $0x30] sm:$0xff]
    %v91 = vld [vmem:[#allocation5 + $0x38] sm:$0xff]
    %v92 = vld [vmem:[#allocation5 + $0x40] sm:$0xff]
    %v93 = vld [vmem:[#allocation5 + $0x48] sm:$0xff]
    %v94 = vld [vmem:[#allocation5 + $0x50] sm:$0xff]
    %v95 = vld [vmem:[#allocation5 + $0x58] sm:$0xff]
    %v96 = vld [vmem:[#allocation5 + $0x60] sm:$0xff]
    %v97 = vld [vmem:[#allocation5 + $0x68] sm:$0xff]
    %v98 = vld [vmem:[#allocation5 + $0x70] sm:$0xff]
    %v99 = vld [vmem:[#allocation5 + $0x78] sm:$0xff]
    %v100 = vld [vmem:[#allocation5 + $0x80] sm:$0xff]
    %v101 = vld [vmem:[#allocation5 + $0x88] sm:$0xff]
    %v102 = vld [vmem:[#allocation5 + $0x90] sm:$0xff]
    %v103 = vld [vmem:[#allocation5 + $0x98] sm:$0xff]
    %v104 = vld [vmem:[#allocation5 + $0xa0] sm:$0xff]
    %v105 = vld [vmem:[#allocation5 + $0xa8] sm:$0xff]
    %v106 = vld [vmem:[#allocation5 + $0xb0] sm:$0xff]
    %v107 = vld [vmem:[#allocation5 + $0xb8] sm:$0xff]
    %v108 = vld [vmem:[#allocation5 + $0xc0] sm:$0xff]
    %v109 = vld [vmem:[#allocation5 + $0xc8] sm:$0xff]
    %v110 = vld [vmem:[#allocation5 + $0xd0] sm:$0xff]
    %v111 = vld [vmem:[#allocation5 + $0xd8] sm:$0xff]
    %v112 = vld [vmem:[#allocation5 + $0xe0] sm:$0xff]
    %v113 = vld [vmem:[#allocation5 + $0xe8] sm:$0xff]
    %v114 = vld [vmem:[#allocation5 + $0xf0] sm:$0xff]
    %v115 = vld [vmem:[#allocation5 + $0xf8] sm:$0xff]
    %v116 = vld [vmem:[#allocation5 + $0x100] sm:$0xff]
    %v117 = vld [vmem:[#allocation5 + $0x108] sm:$0xff]
    %v118 = vld [vmem:[#allocation5 + $0x110] sm:$0xff]
    %v119 = vld [vmem:[#allocation5 + $0x118] sm:$0xff]
    %v120 = vld [vmem:[#allocation5 + $0x120] sm:$0xff]
    %v121 = vld [vmem:[#allocation5 + $0x128] sm:$0xff]
    %v122 = vld [vmem:[#allocation5 + $0x130] sm:$0xff]
    %v123 = vld [vmem:[#allocation5 + $0x138] sm:$0xff]
    %v124 = vld [vmem:[#allocation5 + $0x140] sm:$0xff]
    %v125 = vld [vmem:[#allocation5 + $0x148] sm:$0xff]
    %v126 = vld [vmem:[#allocation5 + $0x150] sm:$0xff]
    %v127 = vld [vmem:[#allocation5 + $0x158] sm:$0xff]
    %v128 = vld [vmem:[#allocation5 + $0x160] sm:$0xff]
    %v129 = vld [vmem:[#allocation5 + $0x168] sm:$0xff]
    %v130 = vld [vmem:[#allocation5 + $0x170] sm:$0xff]
    %v131 = vld [vmem:[#allocation5 + $0x178] sm:$0xff]
    %v132 = vld [vmem:[#allocation5 + $0x180] sm:$0xff]
    %v133 = vld [vmem:[#allocation5 + $0x188] sm:$0xff]
    %v134 = vld [vmem:[#allocation5 + $0x190] sm:$0xff]
    %v135 = vld [vmem:[#allocation5 + $0x198] sm:$0xff]
    %v136 = vld [vmem:[#allocation5 + $0x1a0] sm:$0xff]
    %v137 = vld [vmem:[#allocation5 + $0x1a8] sm:$0xff]
    %v138 = vld [vmem:[#allocation5 + $0x1b0] sm:$0xff]
    %v139 = vld [vmem:[#allocation5 + $0x1b8] sm:$0xff]
    %v140 = vld [vmem:[#allocation5 + $0x1c0] sm:$0xff]
    %v141 = vld [vmem:[#allocation5 + $0x1c8] sm:$0xff]
    %v142 = vld [vmem:[#allocation5 + $0x1d0] sm:$0xff]
    %v143 = vld [vmem:[#allocation5 + $0x1d8] sm:$0xff]
    %v144 = vld [vmem:[#allocation5 + $0x1e0] sm:$0xff]
    %v145 = vld [vmem:[#allocation5 + $0x1e8] sm:$0xff]
    %v146 = vld [vmem:[#allocation5 + $0x1f0] sm:$0xff]
    %v147 = vld [vmem:[#allocation5 + $0x1f8] sm:$0xff]
    %v148 = vld [vmem:[#allocation5 + $0x200] sm:$0xff]
    %v149 = vld [vmem:[#allocation5 + $0x208] sm:$0xff]
    %v150 = vld [vmem:[#allocation5 + $0x210] sm:$0xff]
    %v151 = vld [vmem:[#allocation5 + $0x218] sm:$0xff]
    %v152 = vld [vmem:[#allocation5 + $0x220] sm:$0xff]
    %v153 = vld [vmem:[#allocation5 + $0x228] sm:$0xff]
    %v154 = vld [vmem:[#allocation5 + $0x230] sm:$0xff]
    %v155 = vld [vmem:[#allocation5 + $0x238] sm:$0xff]
    %v156 = vld [vmem:[#allocation5 + $0x240] sm:$0xff]
    %v157 = vld [vmem:[#allocation5 + $0x248] sm:$0xff]
    %v158 = vld [vmem:[#allocation5 + $0x250] sm:$0xff]
    %v159 = vld [vmem:[#allocation5 + $0x258] sm:$0xff]
    %v160 = vld [vmem:[#allocation5 + $0x260] sm:$0xff]
    %v161 = vld [vmem:[#allocation5 + $0x268] sm:$0xff]
    %v162 = vld [vmem:[#allocation5 + $0x270] sm:$0xff]
    %v163 = vld [vmem:[#allocation5 + $0x278] sm:$0xff]
    %v164 = vld [vmem:[#allocation5 + $0x280] sm:$0xff]
    %v165 = vld [vmem:[#allocation5 + $0x288] sm:$0xff]
    %v166 = vld [vmem:[#allocation5 + $0x290] sm:$0xff]
    %v167 = vld [vmem:[#allocation5 + $0x298] sm:$0xff]
    %v168 = vld [vmem:[#allocation5 + $0x2a0] sm:$0xff]
    %v169 = vld [vmem:[#allocation5 + $0x2a8] sm:$0xff]
    %v170 = vld [vmem:[#allocation5 + $0x2b0] sm:$0xff]
    %v171 = vld [vmem:[#allocation5 + $0x2b8] sm:$0xff]
    %v172 = vld [vmem:[#allocation5 + $0x2c0] sm:$0xff]
    %v173 = vld [vmem:[#allocation5 + $0x2c8] sm:$0xff]
    %v174 = vld [vmem:[#allocation5 + $0x2d0] sm:$0xff]
    %v175 = vld [vmem:[#allocation5 + $0x2d8] sm:$0xff]
    %v176 = vld [vmem:[#allocation5 + $0x2e0] sm:$0xff]
    %v177 = vld [vmem:[#allocation5 + $0x2e8] sm:$0xff]
    %v178 = vld [vmem:[#allocation5 + $0x2f0] sm:$0xff]
    %v179 = vld [vmem:[#allocation5 + $0x2f8] sm:$0xff]
    %v180 = vld [vmem:[#allocation5 + $0x300] sm:$0xff]
    %v181 = vld [vmem:[#allocation5 + $0x308] sm:$0xff]
    %v182 = vld [vmem:[#allocation5 + $0x310] sm:$0xff]
    %v183 = vld [vmem:[#allocation5 + $0x318] sm:$0xff]
    %v184 = vld [vmem:[#allocation5 + $0x320] sm:$0xff]
    %v185 = vld [vmem:[#allocation5 + $0x328] sm:$0xff]
    %v186 = vld [vmem:[#allocation5 + $0x330] sm:$0xff]
    %v187 = vld [vmem:[#allocation5 + $0x338] sm:$0xff]
    %v188 = vld [vmem:[#allocation5 + $0x340] sm:$0xff]
    %v189 = vld [vmem:[#allocation5 + $0x348] sm:$0xff]
    %v190 = vld [vmem:[#allocation5 + $0x350] sm:$0xff]
    %v191 = vld [vmem:[#allocation5 + $0x358] sm:$0xff]
    %v192 = vld [vmem:[#allocation5 + $0x360] sm:$0xff]
    %v193 = vld [vmem:[#allocation5 + $0x368] sm:$0xff]
    %v194 = vld [vmem:[#allocation5 + $0x370] sm:$0xff]
    %v195 = vld [vmem:[#allocation5 + $0x378] sm:$0xff]
    %v196 = vld [vmem:[#allocation5 + $0x380] sm:$0xff]
    %v197 = vld [vmem:[#allocation5 + $0x388] sm:$0xff]
    %v198 = vld [vmem:[#allocation5 + $0x390] sm:$0xff]
    %v199 = vld [vmem:[#allocation5 + $0x398] sm:$0xff]
    %v200 = vld [vmem:[#allocation5 + $0x3a0] sm:$0xff]
    %v201 = vld [vmem:[#allocation5 + $0x3a8] sm:$0xff]
    %v202 = vld [vmem:[#allocation5 + $0x3b0] sm:$0xff]
    %v203 = vld [vmem:[#allocation5 + $0x3b8] sm:$0xff]
    %v204 = vld [vmem:[#allocation5 + $0x3c0] sm:$0xff]
    %v205 = vld [vmem:[#allocation5 + $0x3c8] sm:$0xff]
    %v206 = vld [vmem:[#allocation5 + $0x3d0] sm:$0xff]
    %v207 = vld [vmem:[#allocation5 + $0x3d8] sm:$0xff]
    %v208 = vld [vmem:[#allocation5 + $0x3e0] sm:$0xff]
    %v209 = vld [vmem:[#allocation5 + $0x3e8] sm:$0xff]
    %v210 = vld [vmem:[#allocation5 + $0x3f0] sm:$0xff]
    %v211 = vld [vmem:[#allocation5 + $0x3f8] sm:$0xff]
    %v212 = vld [vmem:[#allocation5 + $0x400] sm:$0xff]
    %v213 = vld [vmem:[#allocation5 + $0x408] sm:$0xff]
    %v214 = vld [vmem:[#allocation5 + $0x410] sm:$0xff]
    %v215 = vld [vmem:[#allocation5 + $0x418] sm:$0xff]
    %v216 = vld [vmem:[#allocation5 + $0x420] sm:$0xff]
    %v217 = vld [vmem:[#allocation5 + $0x428] sm:$0xff]
    %v218 = vld [vmem:[#allocation5 + $0x430] sm:$0xff]
    %v219 = vld [vmem:[#allocation5 + $0x438] sm:$0xff]
    %v220 = vld [vmem:[#allocation5 + $0x440] sm:$0xff]
    %v221 = vld [vmem:[#allocation5 + $0x448] sm:$0xff]
    %v222 = vld [vmem:[#allocation5 + $0x450] sm:$0xff]
    %v223 = vld [vmem:[#allocation5 + $0x458] sm:$0xff]
    %v224 = vld [vmem:[#allocation5 + $0x460] sm:$0xff]
    %v225 = vld [vmem:[#allocation5 + $0x468] sm:$0xff]
    %v226 = vld [vmem:[#allocation5 + $0x470] sm:$0xff]
    %v227 = vld [vmem:[#allocation5 + $0x478] sm:$0xff]
    %v228 = vld [vmem:[#allocation5 + $0x480] sm:$0xff]
    %v229 = vld [vmem:[#allocation5 + $0x488] sm:$0xff]
    %v230 = vld [vmem:[#allocation5 + $0x490] sm:$0xff]
    %v231 = vld [vmem:[#allocation5 + $0x498] sm:$0xff]
    %v232 = vld [vmem:[#allocation5 + $0x4a0] sm:$0xff]
    %v233 = vld [vmem:[#allocation5 + $0x4a8] sm:$0xff]
    %v234 = vld [vmem:[#allocation5 + $0x4b0] sm:$0xff]
    %v235 = vld [vmem:[#allocation5 + $0x4b8] sm:$0xff]
    %v236 = vld [vmem:[#allocation5 + $0x4c0] sm:$0xff]
    %v237 = vld [vmem:[#allocation5 + $0x4c8] sm:$0xff]
    %v238 = vld [vmem:[#allocation5 + $0x4d0] sm:$0xff]
    %v239 = vld [vmem:[#allocation5 + $0x4d8] sm:$0xff]
    %v240 = vld [vmem:[#allocation5 + $0x4e0] sm:$0xff]
    %v241 = vld [vmem:[#allocation5 + $0x4e8] sm:$0xff]
    %v242 = vld [vmem:[#allocation5 + $0x4f0] sm:$0xff]
    %v243 = vld [vmem:[#allocation5 + $0x4f8] sm:$0xff]
    %v244 = vld [vmem:[#allocation5 + $0x500] sm:$0xff]
    %v245 = vld [vmem:[#allocation5 + $0x508] sm:$0xff]
    %v246 = vld [vmem:[#allocation5 + $0x510] sm:$0xff]
    %v247 = vld [vmem:[#allocation5 + $0x518] sm:$0xff]
    %v248 = vld [vmem:[#allocation5 + $0x520] sm:$0xff]
    %v249 = vld [vmem:[#allocation5 + $0x528] sm:$0xff]
    %v250 = vld [vmem:[#allocation5 + $0x530] sm:$0xff]
    %v251 = vld [vmem:[#allocation5 + $0x538] sm:$0xff]
    %v252 = vld [vmem:[#allocation5 + $0x540] sm:$0xff]
    %v253 = vld [vmem:[#allocation5 + $0x548] sm:$0xff]
    %v254 = vld [vmem:[#allocation5 + $0x550] sm:$0xff]
    %v255 = vld [vmem:[#allocation5 + $0x558] sm:$0xff]
    %v256 = vld [vmem:[#allocation5 + $0x560] sm:$0xff]
    %v257 = vld [vmem:[#allocation5 + $0x568] sm:$0xff]
    %v258 = vld [vmem:[#allocation5 + $0x570] sm:$0xff]
    %v259 = vld [vmem:[#allocation5 + $0x578] sm:$0xff]
    %v260 = vld [vmem:[#allocation5 + $0x580] sm:$0xff]
    %v261 = vld [vmem:[#allocation5 + $0x588] sm:$0xff]
    %v262 = vld [vmem:[#allocation5 + $0x590] sm:$0xff]
    %v263 = vld [vmem:[#allocation5 + $0x598] sm:$0xff]
    %v264 = vld [vmem:[#allocation5 + $0x5a0] sm:$0xff]
    %v265 = vld [vmem:[#allocation5 + $0x5a8] sm:$0xff]
    %v266 = vld [vmem:[#allocation5 + $0x5b0] sm:$0xff]
    %v267 = vld [vmem:[#allocation5 + $0x5b8] sm:$0xff]
    %v268 = vld [vmem:[#allocation5 + $0x5c0] sm:$0xff]
    %v269 = vld [vmem:[#allocation5 + $0x5c8] sm:$0xff]
    %v270 = vld [vmem:[#allocation5 + $0x5d0] sm:$0xff]
    %v271 = vld [vmem:[#allocation5 + $0x5d8] sm:$0xff]
    %v272 = vld [vmem:[#allocation5 + $0x5e0] sm:$0xff]
    %v273 = vld [vmem:[#allocation5 + $0x5e8] sm:$0xff]
    %v274 = vld [vmem:[#allocation5 + $0x5f0] sm:$0xff]
    %v275 = vld [vmem:[#allocation5 + $0x5f8] sm:$0xff]
    %v276 = vld [vmem:[#allocation5 + $0x600] sm:$0xff]
    %v277 = vld [vmem:[#allocation5 + $0x608] sm:$0xff]
    %v278 = vld [vmem:[#allocation5 + $0x610] sm:$0xff]
    %v279 = vld [vmem:[#allocation5 + $0x618] sm:$0xff]
    %v280 = vld [vmem:[#allocation5 + $0x620] sm:$0xff]
    %v281 = vld [vmem:[#allocation5 + $0x628] sm:$0xff]
    %v282 = vld [vmem:[#allocation5 + $0x630] sm:$0xff]
    %v283 = vld [vmem:[#allocation5 + $0x638] sm:$0xff]
    %v284 = vld [vmem:[#allocation5 + $0x640] sm:$0xff]
    %v285 = vld [vmem:[#allocation5 + $0x648] sm:$0xff]
    %v286 = vld [vmem:[#allocation5 + $0x650] sm:$0xff]
    %v287 = vld [vmem:[#allocation5 + $0x658] sm:$0xff]
    %v288 = vld [vmem:[#allocation5 + $0x660] sm:$0xff]
    %v289 = vld [vmem:[#allocation5 + $0x668] sm:$0xff]
    %v290 = vld [vmem:[#allocation5 + $0x670] sm:$0xff]
    %v291 = vld [vmem:[#allocation5 + $0x678] sm:$0xff]
    %v292 = vld [vmem:[#allocation5 + $0x680] sm:$0xff]
    %v293 = vld [vmem:[#allocation5 + $0x688] sm:$0xff]
    %v294 = vld [vmem:[#allocation5 + $0x690] sm:$0xff]
    %v295 = vld [vmem:[#allocation5 + $0x698] sm:$0xff]
    %v296 = vld [vmem:[#allocation5 + $0x6a0] sm:$0xff]
    %v297 = vld [vmem:[#allocation5 + $0x6a8] sm:$0xff]
    %v298 = vld [vmem:[#allocation5 + $0x6b0] sm:$0xff]
    %v299 = vld [vmem:[#allocation5 + $0x6b8] sm:$0xff]
    %v300 = vld [vmem:[#allocation5 + $0x6c0] sm:$0xff]
    %v301 = vld [vmem:[#allocation5 + $0x6c8] sm:$0xff]
    %v302 = vld [vmem:[#allocation5 + $0x6d0] sm:$0xff]
    %v303 = vld [vmem:[#allocation5 + $0x6d8] sm:$0xff]
    %v304 = vld [vmem:[#allocation5 + $0x6e0] sm:$0xff]
    %v305 = vld [vmem:[#allocation5 + $0x6e8] sm:$0xff]
    %v306 = vld [vmem:[#allocation5 + $0x6f0] sm:$0xff]
    %v307 = vld [vmem:[#allocation5 + $0x6f8] sm:$0xff]
    %v308 = vld [vmem:[#allocation5 + $0x700] sm:$0xff]
    %v309 = vld [vmem:[#allocation5 + $0x708] sm:$0xff]
    %v310 = vld [vmem:[#allocation5 + $0x710] sm:$0xff]
    %v311 = vld [vmem:[#allocation5 + $0x718] sm:$0xff]
    %v312 = vld [vmem:[#allocation5 + $0x720] sm:$0xff]
    %v313 = vld [vmem:[#allocation5 + $0x728] sm:$0xff]
    %v314 = vld [vmem:[#allocation5 + $0x730] sm:$0xff]
    %v315 = vld [vmem:[#allocation5 + $0x738] sm:$0xff]
    %v316 = vld [vmem:[#allocation5 + $0x740] sm:$0xff]
    %v317 = vld [vmem:[#allocation5 + $0x748] sm:$0xff]
    %v318 = vld [vmem:[#allocation5 + $0x750] sm:$0xff]
    %v319 = vld [vmem:[#allocation5 + $0x758] sm:$0xff]
    %v320 = vld [vmem:[#allocation5 + $0x760] sm:$0xff]
    %v321 = vld [vmem:[#allocation5 + $0x768] sm:$0xff]
    %v322 = vld [vmem:[#allocation5 + $0x770] sm:$0xff]
    %v323 = vld [vmem:[#allocation5 + $0x778] sm:$0xff]
    %v324 = vld [vmem:[#allocation5 + $0x780] sm:$0xff]
    %v325 = vld [vmem:[#allocation5 + $0x788] sm:$0xff]
    %v326 = vld [vmem:[#allocation5 + $0x790] sm:$0xff]
    %v327 = vld [vmem:[#allocation5 + $0x798] sm:$0xff]
    %v328 = vld [vmem:[#allocation5 + $0x7a0] sm:$0xff]
    %v329 = vld [vmem:[#allocation5 + $0x7a8] sm:$0xff]
    %v330 = vld [vmem:[#allocation5 + $0x7b0] sm:$0xff]
    %v331 = vld [vmem:[#allocation5 + $0x7b8] sm:$0xff]
    %v332 = vld [vmem:[#allocation5 + $0x7c0] sm:$0xff]
    %v333 = vld [vmem:[#allocation5 + $0x7c8] sm:$0xff]
    %v334 = vld [vmem:[#allocation5 + $0x7d0] sm:$0xff]
    %v335 = vld [vmem:[#allocation5 + $0x7d8] sm:$0xff]
    %v336 = vld [vmem:[#allocation5 + $0x7e0] sm:$0xff]
    %v337 = vld [vmem:[#allocation5 + $0x7e8] sm:$0xff]
    %v338 = vld [vmem:[#allocation5 + $0x7f0] sm:$0xff]
    %v339 = vld [vmem:[#allocation5 + $0x7f8] sm:$0xff]
    %v340 = vld [vmem:[#allocation5 + $0x800] sm:$0xff]
    %v341 = vld [vmem:[#allocation5 + $0x808] sm:$0xff]
    %v342 = vld [vmem:[#allocation5 + $0x810] sm:$0xff]
    %v343 = vld [vmem:[#allocation5 + $0x818] sm:$0xff]
    %v344 = vld [vmem:[#allocation5 + $0x820] sm:$0xff]
    %v345 = vld [vmem:[#allocation5 + $0x828] sm:$0xff]
    %v346 = vld [vmem:[#allocation5 + $0x830] sm:$0xff]
    %v347 = vld [vmem:[#allocation5 + $0x838] sm:$0xff]
    %v348 = vld [vmem:[#allocation5 + $0x840] sm:$0xff]
    %v349 = vld [vmem:[#allocation5 + $0x848] sm:$0xff]
    %v350 = vld [vmem:[#allocation5 + $0x850] sm:$0xff]
    %v351 = vld [vmem:[#allocation5 + $0x858] sm:$0xff]
    %v352 = vld [vmem:[#allocation5 + $0x860] sm:$0xff]
    %v353 = vld [vmem:[#allocation5 + $0x868] sm:$0xff]
    %v354 = vld [vmem:[#allocation5 + $0x870] sm:$0xff]
    %v355 = vld [vmem:[#allocation5 + $0x878] sm:$0xff]
    %v356 = vld [vmem:[#allocation5 + $0x880] sm:$0xff]
    %v357 = vld [vmem:[#allocation5 + $0x888] sm:$0xff]
    %v358 = vld [vmem:[#allocation5 + $0x890] sm:$0xff]
    %v359 = vld [vmem:[#allocation5 + $0x898] sm:$0xff]
    %v360 = vld [vmem:[#allocation5 + $0x8a0] sm:$0xff]
    %v361 = vld [vmem:[#allocation5 + $0x8a8] sm:$0xff]
    %v362 = vld [vmem:[#allocation5 + $0x8b0] sm:$0xff]
    %v363 = vld [vmem:[#allocation5 + $0x8b8] sm:$0xff]
    %v364 = vld [vmem:[#allocation5 + $0x8c0] sm:$0xff]
    %v365 = vld [vmem:[#allocation5 + $0x8c8] sm:$0xff]
    %v366 = vld [vmem:[#allocation5 + $0x8d0] sm:$0xff]
    %v367 = vld [vmem:[#allocation5 + $0x8d8] sm:$0xff]
    %v368 = vld [vmem:[#allocation5 + $0x8e0] sm:$0xff]
    %v369 = vld [vmem:[#allocation5 + $0x8e8] sm:$0xff]
    %v370 = vld [vmem:[#allocation5 + $0x8f0] sm:$0xff]
    %v371 = vld [vmem:[#allocation5 + $0x8f8] sm:$0xff]
    %v372 = vld [vmem:[#allocation5 + $0x900] sm:$0xff]
    %v373 = vld [vmem:[#allocation5 + $0x908] sm:$0xff]
    %v374 = vld [vmem:[#allocation5 + $0x910] sm:$0xff]
    %v375 = vld [vmem:[#allocation5 + $0x918] sm:$0xff]
    %v376 = vld [vmem:[#allocation5 + $0x920] sm:$0xff]
    %v377 = vld [vmem:[#allocation5 + $0x928] sm:$0xff]
    %v378 = vld [vmem:[#allocation5 + $0x930] sm:$0xff]
    %v379 = vld [vmem:[#allocation5 + $0x938] sm:$0xff]
    %v380 = vld [vmem:[#allocation5 + $0x940] sm:$0xff]
    %v381 = vld [vmem:[#allocation5 + $0x948] sm:$0xff]
    %v382 = vld [vmem:[#allocation5 + $0x950] sm:$0xff]
    %v383 = vld [vmem:[#allocation5 + $0x958] sm:$0xff]
    %v384 = vld [vmem:[#allocation5 + $0x960] sm:$0xff]
    %v385 = vld [vmem:[#allocation5 + $0x968] sm:$0xff]
    %v386 = vld [vmem:[#allocation5 + $0x970] sm:$0xff]
    %v387 = vld [vmem:[#allocation5 + $0x978] sm:$0xff]
    %v388 = vld [vmem:[#allocation5 + $0x980] sm:$0xff]
    %v389 = vld [vmem:[#allocation5 + $0x988] sm:$0xff]
    %v390 = vld [vmem:[#allocation5 + $0x990] sm:$0xff]
    %v391 = vld [vmem:[#allocation5 + $0x998] sm:$0xff]
    %v392 = vld [vmem:[#allocation5 + $0x9a0] sm:$0xff]
    %v393 = vld [vmem:[#allocation5 + $0x9a8] sm:$0xff]
    %v394 = vld [vmem:[#allocation5 + $0x9b0] sm:$0xff]
    %v395 = vld [vmem:[#allocation5 + $0x9b8] sm:$0xff]
    %v396 = vld [vmem:[#allocation5 + $0x9c0] sm:$0xff]
    %v397 = vld [vmem:[#allocation5 + $0x9c8] sm:$0xff]
    %v398 = vld [vmem:[#allocation5 + $0x9d0] sm:$0xff]
    %v399 = vld [vmem:[#allocation5 + $0x9d8] sm:$0xff]
    %v400 = vld [vmem:[#allocation5 + $0x9e0] sm:$0xff]
    %v401 = vld [vmem:[#allocation5 + $0x9e8] sm:$0xff]
    %v402 = vld [vmem:[#allocation5 + $0x9f0] sm:$0xff]
    %v403 = vld [vmem:[#allocation5 + $0x9f8] sm:$0xff]
    %v404 = vld [vmem:[#allocation5 + $0xa00] sm:$0xff]
    %v405 = vld [vmem:[#allocation5 + $0xa08] sm:$0xff]
    %v406 = vld [vmem:[#allocation5 + $0xa10] sm:$0xff]
    %v407 = vld [vmem:[#allocation5 + $0xa18] sm:$0xff]
    %v408 = vld [vmem:[#allocation5 + $0xa20] sm:$0xff]
    %v409 = vld [vmem:[#allocation5 + $0xa28] sm:$0xff]
    %v410 = vld [vmem:[#allocation5 + $0xa30] sm:$0xff]
    %v411 = vld [vmem:[#allocation5 + $0xa38] sm:$0xff]
    %v412 = vld [vmem:[#allocation5 + $0xa40] sm:$0xff]
    %v413 = vld [vmem:[#allocation5 + $0xa48] sm:$0xff]
    %v414 = vld [vmem:[#allocation5 + $0xa50] sm:$0xff]
    %v415 = vld [vmem:[#allocation5 + $0xa58] sm:$0xff]
    %v416 = vld [vmem:[#allocation5 + $0xa60] sm:$0xff]
    %v417 = vld [vmem:[#allocation5 + $0xa68] sm:$0xff]
    %v418 = vld [vmem:[#allocation5 + $0xa70] sm:$0xff]
    %v419 = vld [vmem:[#allocation5 + $0xa78] sm:$0xff]
    %v420 = vld [vmem:[#allocation5 + $0xa80] sm:$0xff]
    %v421 = vld [vmem:[#allocation5 + $0xa88] sm:$0xff]
    %v422 = vld [vmem:[#allocation5 + $0xa90] sm:$0xff]
    %v423 = vld [vmem:[#allocation5 + $0xa98] sm:$0xff]
    %v424 = vld [vmem:[#allocation5 + $0xaa0] sm:$0xff]
    %v425 = vld [vmem:[#allocation5 + $0xaa8] sm:$0xff]
    %v426 = vld [vmem:[#allocation5 + $0xab0] sm:$0xff]
    %v427 = vld [vmem:[#allocation5 + $0xab8] sm:$0xff]
    %v428 = vld [vmem:[#allocation5 + $0xac0] sm:$0xff]
    %v429 = vld [vmem:[#allocation5 + $0xac8] sm:$0xff]
    %v430 = vld [vmem:[#allocation5 + $0xad0] sm:$0xff]
    %v431 = vld [vmem:[#allocation5 + $0xad8] sm:$0xff]
    %v432 = vld [vmem:[#allocation5 + $0xae0] sm:$0xff]
    %v433 = vld [vmem:[#allocation5 + $0xae8] sm:$0xff]
    %v434 = vld [vmem:[#allocation5 + $0xaf0] sm:$0xff]
    %v435 = vld [vmem:[#allocation5 + $0xaf8] sm:$0xff]
    %v436 = vld [vmem:[#allocation5 + $0xb00] sm:$0xff]
    %v437 = vld [vmem:[#allocation5 + $0xb08] sm:$0xff]
    %v438 = vld [vmem:[#allocation5 + $0xb10] sm:$0xff]
    %v439 = vld [vmem:[#allocation5 + $0xb18] sm:$0xff]
    %v440 = vld [vmem:[#allocation5 + $0xb20] sm:$0xff]
    %v441 = vld [vmem:[#allocation5 + $0xb28] sm:$0xff]
    %v442 = vld [vmem:[#allocation5 + $0xb30] sm:$0xff]
    %v443 = vld [vmem:[#allocation5 + $0xb38] sm:$0xff]
    %v444 = vld [vmem:[#allocation5 + $0xb40] sm:$0xff]
    %v445 = vld [vmem:[#allocation5 + $0xb48] sm:$0xff]
    %v446 = vld [vmem:[#allocation5 + $0xb50] sm:$0xff]
    %v447 = vld [vmem:[#allocation5 + $0xb58] sm:$0xff]
    %v448 = vld [vmem:[#allocation5 + $0xb60] sm:$0xff]
    %v449 = vld [vmem:[#allocation5 + $0xb68] sm:$0xff]
    %v450 = vld [vmem:[#allocation5 + $0xb70] sm:$0xff]
    %v451 = vld [vmem:[#allocation5 + $0xb78] sm:$0xff]
    %v452 = vld [vmem:[#allocation5 + $0xb80] sm:$0xff]
    %v453 = vld [vmem:[#allocation5 + $0xb88] sm:$0xff]
    %v454 = vld [vmem:[#allocation5 + $0xb90] sm:$0xff]
    %v455 = vld [vmem:[#allocation5 + $0xb98] sm:$0xff]
    %v456 = vld [vmem:[#allocation5 + $0xba0] sm:$0xff]
    %v457 = vld [vmem:[#allocation5 + $0xba8] sm:$0xff]
    %v458 = vld [vmem:[#allocation5 + $0xbb0] sm:$0xff]
    %v459 = vld [vmem:[#allocation5 + $0xbb8] sm:$0xff]
    %v460 = vld [vmem:[#allocation5 + $0xbc0] sm:$0xff]
    %v461 = vld [vmem:[#allocation5 + $0xbc8] sm:$0xff]
    %v462 = vld [vmem:[#allocation5 + $0xbd0] sm:$0xff]
    %v463 = vld [vmem:[#allocation5 + $0xbd8] sm:$0xff]
    %v464 = vld [vmem:[#allocation5 + $0xbe0] sm:$0xff]
    %v465 = vld [vmem:[#allocation5 + $0xbe8] sm:$0xff]
    %v466 = vld [vmem:[#allocation5 + $0xbf0] sm:$0xff]
    %v467 = vld [vmem:[#allocation5 + $0xbf8] sm:$0xff]
    %v468 = vld [vmem:[#allocation5 + $0xc00] sm:$0xff]
    %v469 = vld [vmem:[#allocation5 + $0xc08] sm:$0xff]
    %v470 = vld [vmem:[#allocation5 + $0xc10] sm:$0xff]
    %v471 = vld [vmem:[#allocation5 + $0xc18] sm:$0xff]
    %v472 = vld [vmem:[#allocation5 + $0xc20] sm:$0xff]
    %v473 = vld [vmem:[#allocation5 + $0xc28] sm:$0xff]
    %v474 = vld [vmem:[#allocation5 + $0xc30] sm:$0xff]
    %v475 = vld [vmem:[#allocation5 + $0xc38] sm:$0xff]
    %v476 = vld [vmem:[#allocation5 + $0xc40] sm:$0xff]
    %v477 = vld [vmem:[#allocation5 + $0xc48] sm:$0xff]
    %v478 = vld [vmem:[#allocation5 + $0xc50] sm:$0xff]
    %v479 = vld [vmem:[#allocation5 + $0xc58] sm:$0xff]
    %v480 = vld [vmem:[#allocation5 + $0xc60] sm:$0xff]
    %v481 = vld [vmem:[#allocation5 + $0xc68] sm:$0xff]
    %v482 = vld [vmem:[#allocation5 + $0xc70] sm:$0xff]
    %v483 = vld [vmem:[#allocation5 + $0xc78] sm:$0xff]
    %v484 = vld [vmem:[#allocation5 + $0xc80] sm:$0xff]
    %v485 = vld [vmem:[#allocation5 + $0xc88] sm:$0xff]
    %v486 = vld [vmem:[#allocation5 + $0xc90] sm:$0xff]
    %v487 = vld [vmem:[#allocation5 + $0xc98] sm:$0xff]
    %v488 = vld [vmem:[#allocation5 + $0xca0] sm:$0xff]
    %v489 = vld [vmem:[#allocation5 + $0xca8] sm:$0xff]
    %v490 = vld [vmem:[#allocation5 + $0xcb0] sm:$0xff]
    %v491 = vld [vmem:[#allocation5 + $0xcb8] sm:$0xff]
    %v492 = vld [vmem:[#allocation5 + $0xcc0] sm:$0xff]
    %v493 = vld [vmem:[#allocation5 + $0xcc8] sm:$0xff]
    %v494 = vld [vmem:[#allocation5 + $0xcd0] sm:$0xff]
    %v495 = vld [vmem:[#allocation5 + $0xcd8] sm:$0xff]
    %v496 = vld [vmem:[#allocation5 + $0xce0] sm:$0xff]
    %v497 = vld [vmem:[#allocation5 + $0xce8] sm:$0xff]
    %v498 = vld [vmem:[#allocation5 + $0xcf0] sm:$0xff]
    %v499 = vld [vmem:[#allocation5 + $0xcf8] sm:$0xff]
    %v500 = vld [vmem:[#allocation5 + $0xd00] sm:$0xff]
    %v501 = vld [vmem:[#allocation5 + $0xd08] sm:$0xff]
    %v502 = vld [vmem:[#allocation5 + $0xd10] sm:$0xff]
    %v503 = vld [vmem:[#allocation5 + $0xd18] sm:$0xff]
    %v504 = vld [vmem:[#allocation5 + $0xd20] sm:$0xff]
    %v505 = vld [vmem:[#allocation5 + $0xd28] sm:$0xff]
    %v506 = vld [vmem:[#allocation5 + $0xd30] sm:$0xff]
    %v507 = vld [vmem:[#allocation5 + $0xd38] sm:$0xff]
    %v508 = vld [vmem:[#allocation5 + $0xd40] sm:$0xff]
    %v509 = vld [vmem:[#allocation5 + $0xd48] sm:$0xff]
    %v510 = vld [vmem:[#allocation5 + $0xd50] sm:$0xff]
    %v511 = vld [vmem:[#allocation5 + $0xd58] sm:$0xff]
    %v512 = vld [vmem:[#allocation5 + $0xd60] sm:$0xff]
    %v513 = vld [vmem:[#allocation5 + $0xd68] sm:$0xff]
    %v514 = vld [vmem:[#allocation5 + $0xd70] sm:$0xff]
    %v515 = vld [vmem:[#allocation5 + $0xd78] sm:$0xff]
    %v516 = vld [vmem:[#allocation5 + $0xd80] sm:$0xff]
    %v517 = vld [vmem:[#allocation5 + $0xd88] sm:$0xff]
    %v518 = vld [vmem:[#allocation5 + $0xd90] sm:$0xff]
    %v519 = vld [vmem:[#allocation5 + $0xd98] sm:$0xff]
    %v520 = vld [vmem:[#allocation5 + $0xda0] sm:$0xff]
    %v521 = vld [vmem:[#allocation5 + $0xda8] sm:$0xff]
    %v522 = vld [vmem:[#allocation5 + $0xdb0] sm:$0xff]
    %v523 = vld [vmem:[#allocation5 + $0xdb8] sm:$0xff]
    %v524 = vld [vmem:[#allocation5 + $0xdc0] sm:$0xff]
    %v525 = vld [vmem:[#allocation5 + $0xdc8] sm:$0x1]
    %v526 = vld [vmem:[#allocation5 + $0xdd0] sm:$0x1]
    %v527 = vld [vmem:[#allocation5 + $0xdd8] sm:$0x1]
    %v528 = vld [vmem:[#allocation5 + $0xde0] sm:$0x1]
    %v529 = vld [vmem:[#allocation5 + $0xde8] sm:$0x1]
    %v530 = vld [vmem:[#allocation5 + $0xdf0] sm:$0x1]
    %v531 = vld [vmem:[#allocation5 + $0xdf8] sm:$0x1]
    %v532 = vld [vmem:[#allocation5 + $0xe00] sm:$0x1]
    %v533 = vld [vmem:[#allocation5 + $0xe08] sm:$0x1]
    %v534 = vld [vmem:[#allocation5 + $0xe10] sm:$0x1]
    %v535 = vld [vmem:[#allocation5 + $0xe18] sm:$0x1]
    %v536 = vld [vmem:[#allocation5 + $0xe20] sm:$0x1]
    %v537 = vld [vmem:[#allocation5 + $0xe28] sm:$0x1]
    %v538 = vld [vmem:[#allocation5 + $0xe30] sm:$0x1]
    %v539 = vld [vmem:[#allocation5 + $0xe38] sm:$0x1]
    %v540 = vld [vmem:[#allocation5 + $0xe40] sm:$0x1]
    %v541 = vld [vmem:[#allocation5 + $0xe48] sm:$0x1]
    %v542 = vld [vmem:[#allocation5 + $0xe50] sm:$0x1]
    %v543 = vld [vmem:[#allocation5 + $0xe58] sm:$0x1]
    %v544 = vld [vmem:[#allocation5 + $0xe60] sm:$0x1]
    %v545 = vld [vmem:[#allocation5 + $0xe68] sm:$0x1]
    %v546 = vld [vmem:[#allocation7] sm:$0xff]
    %v547 = vld [vmem:[#allocation7 + $0x8] sm:$0xff]
    %v548 = vld [vmem:[#allocation7 + $0x10] sm:$0x1f]
    %v552 = vlaneseq
    %v553 = vshrl.u32 %v552, 7
    %v554 = vsub.s32 0, %v553
    %v555 = vrot.slane %v546, %v554
    %v556 = vlaneseq
    %v557 = vshrl.u32 %v556, 7
    %v558 = vsub.s32 1, %v557
    %v559 = vrot.slane %v546, %v558
    %v560 = vlaneseq
    %v561 = vshrl.u32 %v560, 7
    %v562 = vsub.s32 2, %v561
    %v563 = vrot.slane %v546, %v562
    %v564 = vlaneseq
    %v565 = vshrl.u32 %v564, 7
    %v566 = vsub.s32 3, %v565
    %v567 = vrot.slane %v546, %v566
    %v568 = vlaneseq
    %v569 = vshrl.u32 %v568, 7
    %v570 = vsub.s32 4, %v569
    %v571 = vrot.slane %v546, %v570
    %v572 = vlaneseq
    %v573 = vshrl.u32 %v572, 7
    %v574 = vsub.s32 5, %v573
    %v575 = vrot.slane %v546, %v574
    %v576 = vlaneseq
    %v577 = vshrl.u32 %v576, 7
    %v578 = vsub.s32 6, %v577
    %v579 = vrot.slane %v546, %v578
    %v580 = vlaneseq
    %v581 = vshrl.u32 %v580, 7
    %v582 = vsub.s32 7, %v581
    %v583 = vrot.slane %v546, %v582
    %v584 = vlaneseq
    %v585 = vshrl.u32 %v584, 7
    %v586 = vsub.s32 0, %v585
    %v587 = vrot.slane %v547, %v586
    %v588 = vlaneseq
    %v589 = vshrl.u32 %v588, 7
    %v590 = vsub.s32 1, %v589
    %v591 = vrot.slane %v547, %v590
    %v592 = vlaneseq
    %v593 = vshrl.u32 %v592, 7
    %v594 = vsub.s32 2, %v593
    %v595 = vrot.slane %v547, %v594
    %v596 = vlaneseq
    %v597 = vshrl.u32 %v596, 7
    %v598 = vsub.s32 3, %v597
    %v599 = vrot.slane %v547, %v598
    %v600 = vlaneseq
    %v601 = vshrl.u32 %v600, 7
    %v602 = vsub.s32 4, %v601
    %v603 = vrot.slane %v547, %v602
    %v604 = vlaneseq
    %v605 = vshrl.u32 %v604, 7
    %v606 = vsub.s32 5, %v605
    %v607 = vrot.slane %v547, %v606
    %v608 = vlaneseq
    %v609 = vshrl.u32 %v608, 7
    %v610 = vsub.s32 6, %v609
    %v611 = vrot.slane %v547, %v610
    %v612 = vlaneseq
    %v613 = vshrl.u32 %v612, 7
    %v614 = vsub.s32 7, %v613
    %v615 = vrot.slane %v547, %v614
    %v616 = vlaneseq
    %v617 = vshrl.u32 %v616, 7
    %v618 = vsub.s32 0, %v617
    %v619 = vrot.slane %v548, %v618
    %v620 = vlaneseq
    %v621 = vshrl.u32 %v620, 7
    %v622 = vsub.s32 1, %v621
    %v623 = vrot.slane %v548, %v622
    %v624 = vlaneseq
    %v625 = vshrl.u32 %v624, 7
    %v626 = vsub.s32 2, %v625
    %v627 = vrot.slane %v548, %v626
    %v628 = vlaneseq
    %v629 = vshrl.u32 %v628, 7
    %v630 = vsub.s32 3, %v629
    %v631 = vrot.slane %v548, %v630
    %v632 = vlaneseq
    %v633 = vshrl.u32 %v632, 7
    %v634 = vsub.s32 4, %v633
    %v635 = vrot.slane %v548, %v634
    %v659 = vunpack.c.l.s4 1983009808
    %v660 = vunpack.c.0.s8 %v659
    %v661 = vlaneseq
    %v662 = vshrl.u32 %v661, 7
    %v663 = vsub.s32 %v660, %v662
    %v664 = vrot.slane %v83, %v663
    %v665 = vcombine.high %v664, %v664
    %vm667 = vcmask 334848
    %v668 = vsel %vm667, %v665, 0
    %vm670 = vcmask 1040384
    %v672 = vsel %vm670, %v525, 0
    %v675 = vsel %vm670, %v526, 0
    %v678 = vsel %vm670, %v527, 0
    %v681 = vsel %vm670, %v528, 0
    %v684 = vsel %vm670, %v529, 0
    %v687 = vsel %vm670, %v530, 0
    %v690 = vsel %vm670, %v531, 0
    %v693 = vsel %vm670, %v532, 0
    %v696 = vsel %vm670, %v533, 0
    %v699 = vsel %vm670, %v534, 0
    %v702 = vsel %vm670, %v535, 0
    %v705 = vsel %vm670, %v536, 0
    %v708 = vsel %vm670, %v537, 0
    %v711 = vsel %vm670, %v538, 0
    %v714 = vsel %vm670, %v539, 0
    %v717 = vsel %vm670, %v540, 0
    %v720 = vsel %vm670, %v541, 0
    %v723 = vsel %vm670, %v542, 0
    %v726 = vsel %vm670, %v543, 0
    %v729 = vsel %vm670, %v544, 0
    %v732 = vsel %vm670, %v545, 0
    %734 = vmatprep.subr.mxu0 %v85
    %735 = vmatpush1.msra.mxu0 %v84
    %736 = vmatprep.subr.mxu0 %v106
    %737 = vmatpush1.msra.mxu0 %v105
    %738 = vmatprep.subr.mxu0 %v127
    %739 = vmatpush1.msra.mxu0 %v126
    %740 = vmatprep.subr.mxu0 %v148
    %741 = vmatpush1.msra.mxu0 %v147
    %742 = vmatprep.subr.mxu0 %v169
    %743 = vmatpush1.msra.mxu0 %v168
    %744 = vmatprep.subr.mxu0 %v190
    %745 = vmatpush1.msra.mxu0 %v189
    %746 = vmatprep.subr.mxu0 %v211
    %747 = vmatpush1.msra.mxu0 %v210
    %748 = vmatprep.subr.mxu0 %v232
    %749 = vmatpush1.msra.mxu0 %v231
    %750 = vmatprep.subr.mxu0 %v253
    %751 = vmatpush1.msra.mxu0 %v252
    %752 = vmatprep.subr.mxu0 %v274
    %753 = vmatpush1.msra.mxu0 %v273
    %754 = vmatprep.subr.mxu0 %v295
    %755 = vmatpush1.msra.mxu0 %v294
    %756 = vmatprep.subr.mxu0 %v316
    %757 = vmatpush1.msra.mxu0 %v315
    %758 = vmatprep.subr.mxu0 %v337
    %759 = vmatpush1.msra.mxu0 %v336
    %760 = vmatprep.subr.mxu0 %v358
    %761 = vmatpush1.msra.mxu0 %v357
    %762 = vmatprep.subr.mxu0 %v379
    %763 = vmatpush1.msra.mxu0 %v378
    %764 = vmatprep.subr.mxu0 %v400
    %765 = vmatpush1.msra.mxu0 %v399
    %766 = vmatprep.subr.mxu0 %v421
    %767 = vmatpush1.msra.mxu0 %v420
    %768 = vmatprep.subr.mxu0 %v442
    %769 = vmatpush1.msra.mxu0 %v441
    %770 = vmatprep.subr.mxu0 %v463
    %771 = vmatpush1.msra.mxu0 %v462
    %772 = vmatprep.subr.mxu0 %v484
    %773 = vmatpush1.msra.mxu0 %v483
    %774 = vmatprep.subr.mxu0 %v505
    %775 = vmatpush1.msra.mxu0 %v504
    %776 = vmatprep.subr.mxu0 %v675
    %777 = vmatpush1.msra.mxu0 %v672
    %778 = vmatprep.subr.mxu0 0.0
    %779 = vmatpush1.msra.mxu0 0.0
    %780 = vmatprep.subr.mxu0 0.0
    %781 = vmatpush1.msra.mxu0 0.0
    %782 = vmatprep.subr.mxu0 0.0
    %783 = vmatpush1.msra.mxu0 0.0
    %784 = vmatprep.subr.mxu0 0.0
    %785 = vmatpush1.msra.mxu0 0.0
    %786 = vmatprep.subr.mxu0 0.0
    %787 = vmatpush1.msra.mxu0 0.0
    %788 = vmatprep.subr.mxu0 0.0
    %789 = vmatpush1.msra.mxu0 0.0
    %790 = vmatprep.subr.mxu0 0.0
    %791 = vmatpush1.msra.mxu0 0.0
    %792 = vmatprep.subr.mxu0 0.0
    %793 = vmatpush1.msra.mxu0 0.0
    %794 = vmatprep.subr.mxu0 0.0
    %795 = vmatpush1.msra.mxu0 0.0
    %796 = vmatprep.subr.mxu0 0.0
    %797 = vmatpush1.msra.mxu0 0.0
    %798 = vmatprep.mubr.f32.mxu0 %v668
    %799 = vmatmul.mubr.f32.gmra.mrb[0].mxu0 %v664
    %v800 = vpop.f32.mrb[0].mxu0
    %v801 = vadd.f32 %v555, %v800
    %v802 = vpop.f32.mrb[0].mxu0
    %v803 = vadd.f32 %v559, %v802
    %804 = vdwg.mxu0
    %805 = vmatprep.subr.mxu0 %v87
    %806 = vmatpush1.msra.mxu0 %v86
    %807 = vmatprep.subr.mxu0 %v108
    %808 = vmatpush1.msra.mxu0 %v107
    %809 = vmatprep.subr.mxu0 %v129
    %810 = vmatpush1.msra.mxu0 %v128
    %811 = vmatprep.subr.mxu0 %v150
    %812 = vmatpush1.msra.mxu0 %v149
    %813 = vmatprep.subr.mxu0 %v171
    %814 = vmatpush1.msra.mxu0 %v170
    %815 = vmatprep.subr.mxu0 %v192
    %816 = vmatpush1.msra.mxu0 %v191
    %817 = vmatprep.subr.mxu0 %v213
    %818 = vmatpush1.msra.mxu0 %v212
    %819 = vmatprep.subr.mxu0 %v234
    %820 = vmatpush1.msra.mxu0 %v233
    %821 = vmatprep.subr.mxu0 %v255
    %822 = vmatpush1.msra.mxu0 %v254
    %823 = vmatprep.subr.mxu0 %v276
    %824 = vmatpush1.msra.mxu0 %v275
    %825 = vmatprep.subr.mxu0 %v297
    %826 = vmatpush1.msra.mxu0 %v296
    %827 = vmatprep.subr.mxu0 %v318
    %828 = vmatpush1.msra.mxu0 %v317
    %829 = vmatprep.subr.mxu0 %v339
    %830 = vmatpush1.msra.mxu0 %v338
    %831 = vmatprep.subr.mxu0 %v360
    %832 = vmatpush1.msra.mxu0 %v359
    %833 = vmatprep.subr.mxu0 %v381
    %834 = vmatpush1.msra.mxu0 %v380
    %835 = vmatprep.subr.mxu0 %v402
    %836 = vmatpush1.msra.mxu0 %v401
    %837 = vmatprep.subr.mxu0 %v423
    %838 = vmatpush1.msra.mxu0 %v422
    %839 = vmatprep.subr.mxu0 %v444
    %840 = vmatpush1.msra.mxu0 %v443
    %841 = vmatprep.subr.mxu0 %v465
    %842 = vmatpush1.msra.mxu0 %v464
    %843 = vmatprep.subr.mxu0 %v486
    %844 = vmatpush1.msra.mxu0 %v485
    %845 = vmatprep.subr.mxu0 %v507
    %846 = vmatpush1.msra.mxu0 %v506
    %847 = vmatprep.subr.mxu0 %v681
    %848 = vmatpush1.msra.mxu0 %v678
    %849 = vmatprep.subr.mxu0 0.0
    %850 = vmatpush1.msra.mxu0 0.0
    %851 = vmatprep.subr.mxu0 0.0
    %852 = vmatpush1.msra.mxu0 0.0
    %853 = vmatprep.subr.mxu0 0.0
    %854 = vmatpush1.msra.mxu0 0.0
    %855 = vmatprep.subr.mxu0 0.0
    %856 = vmatpush1.msra.mxu0 0.0
    %857 = vmatprep.subr.mxu0 0.0
    %858 = vmatpush1.msra.mxu0 0.0
    %859 = vmatprep.subr.mxu0 0.0
    %860 = vmatpush1.msra.mxu0 0.0
    %861 = vmatprep.subr.mxu0 0.0
    %862 = vmatpush1.msra.mxu0 0.0
    %863 = vmatprep.subr.mxu0 0.0
    %864 = vmatpush1.msra.mxu0 0.0
    %865 = vmatprep.subr.mxu0 0.0
    %866 = vmatpush1.msra.mxu0 0.0
    %867 = vmatprep.subr.mxu0 0.0
    %868 = vmatpush1.msra.mxu0 0.0
    %869 = vmatprep.mubr.f32.mxu0 %v668
    %870 = vmatmul.mubr.f32.gmra.mrb[0].mxu0 %v664
    %v871 = vpop.f32.mrb[0].mxu0
    %v872 = vadd.f32 %v563, %v871
    %v873 = vpop.f32.mrb[0].mxu0
    %v874 = vadd.f32 %v567, %v873
    %875 = vdwg.mxu0
    %876 = vmatprep.subr.mxu0 %v89
    %877 = vmatpush1.msra.mxu0 %v88
    %878 = vmatprep.subr.mxu0 %v110
    %879 = vmatpush1.msra.mxu0 %v109
    %880 = vmatprep.subr.mxu0 %v131
    %881 = vmatpush1.msra.mxu0 %v130
    %882 = vmatprep.subr.mxu0 %v152
    %883 = vmatpush1.msra.mxu0 %v151
    %884 = vmatprep.subr.mxu0 %v173
    %885 = vmatpush1.msra.mxu0 %v172
    %886 = vmatprep.subr.mxu0 %v194
    %887 = vmatpush1.msra.mxu0 %v193
    %888 = vmatprep.subr.mxu0 %v215
    %889 = vmatpush1.msra.mxu0 %v214
    %890 = vmatprep.subr.mxu0 %v236
    %891 = vmatpush1.msra.mxu0 %v235
    %892 = vmatprep.subr.mxu0 %v257
    %893 = vmatpush1.msra.mxu0 %v256
    %894 = vmatprep.subr.mxu0 %v278
    %895 = vmatpush1.msra.mxu0 %v277
    %896 = vmatprep.subr.mxu0 %v299
    %897 = vmatpush1.msra.mxu0 %v298
    %898 = vmatprep.subr.mxu0 %v320
    %899 = vmatpush1.msra.mxu0 %v319
    %900 = vmatprep.subr.mxu0 %v341
    %901 = vmatpush1.msra.mxu0 %v340
    %902 = vmatprep.subr.mxu0 %v362
    %903 = vmatpush1.msra.mxu0 %v361
    %904 = vmatprep.subr.mxu0 %v383
    %905 = vmatpush1.msra.mxu0 %v382
    %906 = vmatprep.subr.mxu0 %v404
    %907 = vmatpush1.msra.mxu0 %v403
    %908 = vmatprep.subr.mxu0 %v425
    %909 = vmatpush1.msra.mxu0 %v424
    %910 = vmatprep.subr.mxu0 %v446
    %911 = vmatpush1.msra.mxu0 %v445
    %912 = vmatprep.subr.mxu0 %v467
    %913 = vmatpush1.msra.mxu0 %v466
    %914 = vmatprep.subr.mxu0 %v488
    %915 = vmatpush1.msra.mxu0 %v487
    %916 = vmatprep.subr.mxu0 %v509
    %917 = vmatpush1.msra.mxu0 %v508
    %918 = vmatprep.subr.mxu0 %v687
    %919 = vmatpush1.msra.mxu0 %v684
    %920 = vmatprep.subr.mxu0 0.0
    %921 = vmatpush1.msra.mxu0 0.0
    %922 = vmatprep.subr.mxu0 0.0
    %923 = vmatpush1.msra.mxu0 0.0
    %924 = vmatprep.subr.mxu0 0.0
    %925 = vmatpush1.msra.mxu0 0.0
    %926 = vmatprep.subr.mxu0 0.0
    %927 = vmatpush1.msra.mxu0 0.0
    %928 = vmatprep.subr.mxu0 0.0
    %929 = vmatpush1.msra.mxu0 0.0
    %930 = vmatprep.subr.mxu0 0.0
    %931 = vmatpush1.msra.mxu0 0.0
    %932 = vmatprep.subr.mxu0 0.0
    %933 = vmatpush1.msra.mxu0 0.0
    %934 = vmatprep.subr.mxu0 0.0
    %935 = vmatpush1.msra.mxu0 0.0
    %936 = vmatprep.subr.mxu0 0.0
    %937 = vmatpush1.msra.mxu0 0.0
    %938 = vmatprep.subr.mxu0 0.0
    %939 = vmatpush1.msra.mxu0 0.0
    %940 = vmatprep.mubr.f32.mxu0 %v668
    %941 = vmatmul.mubr.f32.gmra.mrb[0].mxu0 %v664
    %v942 = vpop.f32.mrb[0].mxu0
    %v943 = vadd.f32 %v571, %v942
    %v944 = vpop.f32.mrb[0].mxu0
    %v945 = vadd.f32 %v575, %v944
    %946 = vdwg.mxu0
    %947 = vmatprep.subr.mxu0 %v91
    %948 = vmatpush1.msra.mxu0 %v90
    %949 = vmatprep.subr.mxu0 %v112
    %950 = vmatpush1.msra.mxu0 %v111
    %951 = vmatprep.subr.mxu0 %v133
    %952 = vmatpush1.msra.mxu0 %v132
    %953 = vmatprep.subr.mxu0 %v154
    %954 = vmatpush1.msra.mxu0 %v153
    %955 = vmatprep.subr.mxu0 %v175
    %956 = vmatpush1.msra.mxu0 %v174
    %957 = vmatprep.subr.mxu0 %v196
    %958 = vmatpush1.msra.mxu0 %v195
    %959 = vmatprep.subr.mxu0 %v217
    %960 = vmatpush1.msra.mxu0 %v216
    %961 = vmatprep.subr.mxu0 %v238
    %962 = vmatpush1.msra.mxu0 %v237
    %963 = vmatprep.subr.mxu0 %v259
    %964 = vmatpush1.msra.mxu0 %v258
    %965 = vmatprep.subr.mxu0 %v280
    %966 = vmatpush1.msra.mxu0 %v279
    %967 = vmatprep.subr.mxu0 %v301
    %968 = vmatpush1.msra.mxu0 %v300
    %969 = vmatprep.subr.mxu0 %v322
    %970 = vmatpush1.msra.mxu0 %v321
    %971 = vmatprep.subr.mxu0 %v343
    %972 = vmatpush1.msra.mxu0 %v342
    %973 = vmatprep.subr.mxu0 %v364
    %974 = vmatpush1.msra.mxu0 %v363
    %975 = vmatprep.subr.mxu0 %v385
    %976 = vmatpush1.msra.mxu0 %v384
    %977 = vmatprep.subr.mxu0 %v406
    %978 = vmatpush1.msra.mxu0 %v405
    %979 = vmatprep.subr.mxu0 %v427
    %980 = vmatpush1.msra.mxu0 %v426
    %981 = vmatprep.subr.mxu0 %v448
    %982 = vmatpush1.msra.mxu0 %v447
    %983 = vmatprep.subr.mxu0 %v469
    %984 = vmatpush1.msra.mxu0 %v468
    %985 = vmatprep.subr.mxu0 %v490
    %986 = vmatpush1.msra.mxu0 %v489
    %987 = vmatprep.subr.mxu0 %v511
    %988 = vmatpush1.msra.mxu0 %v510
    %989 = vmatprep.subr.mxu0 %v693
    %990 = vmatpush1.msra.mxu0 %v690
    %991 = vmatprep.subr.mxu0 0.0
    %992 = vmatpush1.msra.mxu0 0.0
    %993 = vmatprep.subr.mxu0 0.0
    %994 = vmatpush1.msra.mxu0 0.0
    %995 = vmatprep.subr.mxu0 0.0
    %996 = vmatpush1.msra.mxu0 0.0
    %997 = vmatprep.subr.mxu0 0.0
    %998 = vmatpush1.msra.mxu0 0.0
    %999 = vmatprep.subr.mxu0 0.0
    %1000 = vmatpush1.msra.mxu0 0.0
    %1001 = vmatprep.subr.mxu0 0.0
    %1002 = vmatpush1.msra.mxu0 0.0
    %1003 = vmatprep.subr.mxu0 0.0
    %1004 = vmatpush1.msra.mxu0 0.0
    %1005 = vmatprep.subr.mxu0 0.0
    %1006 = vmatpush1.msra.mxu0 0.0
    %1007 = vmatprep.subr.mxu0 0.0
    %1008 = vmatpush1.msra.mxu0 0.0
    %1009 = vmatprep.subr.mxu0 0.0
    %1010 = vmatpush1.msra.mxu0 0.0
    %1011 = vmatprep.mubr.f32.mxu0 %v668
    %1012 = vmatmul.mubr.f32.gmra.mrb[0].mxu0 %v664
    %v1013 = vpop.f32.mrb[0].mxu0
    %v1014 = vadd.f32 %v579, %v1013
    %v1015 = vpop.f32.mrb[0].mxu0
    %v1016 = vadd.f32 %v583, %v1015
    %1017 = vdwg.mxu0
    %1018 = vmatprep.subr.mxu0 %v93
    %1019 = vmatpush1.msra.mxu0 %v92
    %1020 = vmatprep.subr.mxu0 %v114
    %1021 = vmatpush1.msra.mxu0 %v113
    %1022 = vmatprep.subr.mxu0 %v135
    %1023 = vmatpush1.msra.mxu0 %v134
    %1024 = vmatprep.subr.mxu0 %v156
    %1025 = vmatpush1.msra.mxu0 %v155
    %1026 = vmatprep.subr.mxu0 %v177
    %1027 = vmatpush1.msra.mxu0 %v176
    %1028 = vmatprep.subr.mxu0 %v198
    %1029 = vmatpush1.msra.mxu0 %v197
    %1030 = vmatprep.subr.mxu0 %v219
    %1031 = vmatpush1.msra.mxu0 %v218
    %1032 = vmatprep.subr.mxu0 %v240
    %1033 = vmatpush1.msra.mxu0 %v239
    %1034 = vmatprep.subr.mxu0 %v261
    %1035 = vmatpush1.msra.mxu0 %v260
    %1036 = vmatprep.subr.mxu0 %v282
    %1037 = vmatpush1.msra.mxu0 %v281
    %1038 = vmatprep.subr.mxu0 %v303
    %1039 = vmatpush1.msra.mxu0 %v302
    %1040 = vmatprep.subr.mxu0 %v324
    %1041 = vmatpush1.msra.mxu0 %v323
    %1042 = vmatprep.subr.mxu0 %v345
    %1043 = vmatpush1.msra.mxu0 %v344
    %1044 = vmatprep.subr.mxu0 %v366
    %1045 = vmatpush1.msra.mxu0 %v365
    %1046 = vmatprep.subr.mxu0 %v387
    %1047 = vmatpush1.msra.mxu0 %v386
    %1048 = vmatprep.subr.mxu0 %v408
    %1049 = vmatpush1.msra.mxu0 %v407
    %1050 = vmatprep.subr.mxu0 %v429
    %1051 = vmatpush1.msra.mxu0 %v428
    %1052 = vmatprep.subr.mxu0 %v450
    %1053 = vmatpush1.msra.mxu0 %v449
    %1054 = vmatprep.subr.mxu0 %v471
    %1055 = vmatpush1.msra.mxu0 %v470
    %1056 = vmatprep.subr.mxu0 %v492
    %1057 = vmatpush1.msra.mxu0 %v491
    %1058 = vmatprep.subr.mxu0 %v513
    %1059 = vmatpush1.msra.mxu0 %v512
    %1060 = vmatprep.subr.mxu0 %v699
    %1061 = vmatpush1.msra.mxu0 %v696
    %1062 = vmatprep.subr.mxu0 0.0
    %1063 = vmatpush1.msra.mxu0 0.0
    %1064 = vmatprep.subr.mxu0 0.0
    %1065 = vmatpush1.msra.mxu0 0.0
    %1066 = vmatprep.subr.mxu0 0.0
    %1067 = vmatpush1.msra.mxu0 0.0
    %1068 = vmatprep.subr.mxu0 0.0
    %1069 = vmatpush1.msra.mxu0 0.0
    %1070 = vmatprep.subr.mxu0 0.0
    %1071 = vmatpush1.msra.mxu0 0.0
    %1072 = vmatprep.subr.mxu0 0.0
    %1073 = vmatpush1.msra.mxu0 0.0
    %1074 = vmatprep.subr.mxu0 0.0
    %1075 = vmatpush1.msra.mxu0 0.0
    %1076 = vmatprep.subr.mxu0 0.0
    %1077 = vmatpush1.msra.mxu0 0.0
    %1078 = vmatprep.subr.mxu0 0.0
    %1079 = vmatpush1.msra.mxu0 0.0
    %1080 = vmatprep.subr.mxu0 0.0
    %1081 = vmatpush1.msra.mxu0 0.0
    %1082 = vmatprep.mubr.f32.mxu0 %v668
    %1083 = vmatmul.mubr.f32.gmra.mrb[0].mxu0 %v664
    %v1084 = vpop.f32.mrb[0].mxu0
    %v1085 = vadd.f32 %v587, %v1084
    %v1086 = vpop.f32.mrb[0].mxu0
    %v1087 = vadd.f32 %v591, %v1086
    %1088 = vdwg.mxu0
    %1089 = vmatprep.subr.mxu0 %v95
    %1090 = vmatpush1.msra.mxu0 %v94
    %1091 = vmatprep.subr.mxu0 %v116
    %1092 = vmatpush1.msra.mxu0 %v115
    %1093 = vmatprep.subr.mxu0 %v137
    %1094 = vmatpush1.msra.mxu0 %v136
    %1095 = vmatprep.subr.mxu0 %v158
    %1096 = vmatpush1.msra.mxu0 %v157
    %1097 = vmatprep.subr.mxu0 %v179
    %1098 = vmatpush1.msra.mxu0 %v178
    %1099 = vmatprep.subr.mxu0 %v200
    %1100 = vmatpush1.msra.mxu0 %v199
    %1101 = vmatprep.subr.mxu0 %v221
    %1102 = vmatpush1.msra.mxu0 %v220
    %1103 = vmatprep.subr.mxu0 %v242
    %1104 = vmatpush1.msra.mxu0 %v241
    %1105 = vmatprep.subr.mxu0 %v263
    %1106 = vmatpush1.msra.mxu0 %v262
    %1107 = vmatprep.subr.mxu0 %v284
    %1108 = vmatpush1.msra.mxu0 %v283
    %1109 = vmatprep.subr.mxu0 %v305
    %1110 = vmatpush1.msra.mxu0 %v304
    %1111 = vmatprep.subr.mxu0 %v326
    %1112 = vmatpush1.msra.mxu0 %v325
    %1113 = vmatprep.subr.mxu0 %v347
    %1114 = vmatpush1.msra.mxu0 %v346
    %1115 = vmatprep.subr.mxu0 %v368
    %1116 = vmatpush1.msra.mxu0 %v367
    %1117 = vmatprep.subr.mxu0 %v389
    %1118 = vmatpush1.msra.mxu0 %v388
    %1119 = vmatprep.subr.mxu0 %v410
    %1120 = vmatpush1.msra.mxu0 %v409
    %1121 = vmatprep.subr.mxu0 %v431
    %1122 = vmatpush1.msra.mxu0 %v430
    %1123 = vmatprep.subr.mxu0 %v452
    %1124 = vmatpush1.msra.mxu0 %v451
    %1125 = vmatprep.subr.mxu0 %v473
    %1126 = vmatpush1.msra.mxu0 %v472
    %1127 = vmatprep.subr.mxu0 %v494
    %1128 = vmatpush1.msra.mxu0 %v493
    %1129 = vmatprep.subr.mxu0 %v515
    %1130 = vmatpush1.msra.mxu0 %v514
    %1131 = vmatprep.subr.mxu0 %v705
    %1132 = vmatpush1.msra.mxu0 %v702
    %1133 = vmatprep.subr.mxu0 0.0
    %1134 = vmatpush1.msra.mxu0 0.0
    %1135 = vmatprep.subr.mxu0 0.0
    %1136 = vmatpush1.msra.mxu0 0.0
    %1137 = vmatprep.subr.mxu0 0.0
    %1138 = vmatpush1.msra.mxu0 0.0
    %1139 = vmatprep.subr.mxu0 0.0
    %1140 = vmatpush1.msra.mxu0 0.0
    %1141 = vmatprep.subr.mxu0 0.0
    %1142 = vmatpush1.msra.mxu0 0.0
    %1143 = vmatprep.subr.mxu0 0.0
    %1144 = vmatpush1.msra.mxu0 0.0
    %1145 = vmatprep.subr.mxu0 0.0
    %1146 = vmatpush1.msra.mxu0 0.0
    %1147 = vmatprep.subr.mxu0 0.0
    %1148 = vmatpush1.msra.mxu0 0.0
    %1149 = vmatprep.subr.mxu0 0.0
    %1150 = vmatpush1.msra.mxu0 0.0
    %1151 = vmatprep.subr.mxu0 0.0
    %1152 = vmatpush1.msra.mxu0 0.0
    %1153 = vmatprep.mubr.f32.mxu0 %v668
    %1154 = vmatmul.mubr.f32.gmra.mrb[0].mxu0 %v664
    %v1155 = vpop.f32.mrb[0].mxu0
    %v1156 = vadd.f32 %v595, %v1155
    %v1157 = vpop.f32.mrb[0].mxu0
    %v1158 = vadd.f32 %v599, %v1157
    %1159 = vdwg.mxu0
    %1160 = vmatprep.subr.mxu0 %v97
    %1161 = vmatpush1.msra.mxu0 %v96
    %1162 = vmatprep.subr.mxu0 %v118
    %1163 = vmatpush1.msra.mxu0 %v117
    %1164 = vmatprep.subr.mxu0 %v139
    %1165 = vmatpush1.msra.mxu0 %v138
    %1166 = vmatprep.subr.mxu0 %v160
    %1167 = vmatpush1.msra.mxu0 %v159
    %1168 = vmatprep.subr.mxu0 %v181
    %1169 = vmatpush1.msra.mxu0 %v180
    %1170 = vmatprep.subr.mxu0 %v202
    %1171 = vmatpush1.msra.mxu0 %v201
    %1172 = vmatprep.subr.mxu0 %v223
    %1173 = vmatpush1.msra.mxu0 %v222
    %1174 = vmatprep.subr.mxu0 %v244
    %1175 = vmatpush1.msra.mxu0 %v243
    %1176 = vmatprep.subr.mxu0 %v265
    %1177 = vmatpush1.msra.mxu0 %v264
    %1178 = vmatprep.subr.mxu0 %v286
    %1179 = vmatpush1.msra.mxu0 %v285
    %1180 = vmatprep.subr.mxu0 %v307
    %1181 = vmatpush1.msra.mxu0 %v306
    %1182 = vmatprep.subr.mxu0 %v328
    %1183 = vmatpush1.msra.mxu0 %v327
    %1184 = vmatprep.subr.mxu0 %v349
    %1185 = vmatpush1.msra.mxu0 %v348
    %1186 = vmatprep.subr.mxu0 %v370
    %1187 = vmatpush1.msra.mxu0 %v369
    %1188 = vmatprep.subr.mxu0 %v391
    %1189 = vmatpush1.msra.mxu0 %v390
    %1190 = vmatprep.subr.mxu0 %v412
    %1191 = vmatpush1.msra.mxu0 %v411
    %1192 = vmatprep.subr.mxu0 %v433
    %1193 = vmatpush1.msra.mxu0 %v432
    %1194 = vmatprep.subr.mxu0 %v454
    %1195 = vmatpush1.msra.mxu0 %v453
    %1196 = vmatprep.subr.mxu0 %v475
    %1197 = vmatpush1.msra.mxu0 %v474
    %1198 = vmatprep.subr.mxu0 %v496
    %1199 = vmatpush1.msra.mxu0 %v495
    %1200 = vmatprep.subr.mxu0 %v517
    %1201 = vmatpush1.msra.mxu0 %v516
    %1202 = vmatprep.subr.mxu0 %v711
    %1203 = vmatpush1.msra.mxu0 %v708
    %1204 = vmatprep.subr.mxu0 0.0
    %1205 = vmatpush1.msra.mxu0 0.0
    %1206 = vmatprep.subr.mxu0 0.0
    %1207 = vmatpush1.msra.mxu0 0.0
    %1208 = vmatprep.subr.mxu0 0.0
    %1209 = vmatpush1.msra.mxu0 0.0
    %1210 = vmatprep.subr.mxu0 0.0
    %1211 = vmatpush1.msra.mxu0 0.0
    %1212 = vmatprep.subr.mxu0 0.0
    %1213 = vmatpush1.msra.mxu0 0.0
    %1214 = vmatprep.subr.mxu0 0.0
    %1215 = vmatpush1.msra.mxu0 0.0
    %1216 = vmatprep.subr.mxu0 0.0
    %1217 = vmatpush1.msra.mxu0 0.0
    %1218 = vmatprep.subr.mxu0 0.0
    %1219 = vmatpush1.msra.mxu0 0.0
    %1220 = vmatprep.subr.mxu0 0.0
    %1221 = vmatpush1.msra.mxu0 0.0
    %1222 = vmatprep.subr.mxu0 0.0
    %1223 = vmatpush1.msra.mxu0 0.0
    %1224 = vmatprep.mubr.f32.mxu0 %v668
    %1225 = vmatmul.mubr.f32.gmra.mrb[0].mxu0 %v664
    %v1226 = vpop.f32.mrb[0].mxu0
    %v1227 = vadd.f32 %v603, %v1226
    %v1228 = vpop.f32.mrb[0].mxu0
    %v1229 = vadd.f32 %v607, %v1228
    %1230 = vdwg.mxu0
    %1231 = vmatprep.subr.mxu0 %v99
    %1232 = vmatpush1.msra.mxu0 %v98
    %1233 = vmatprep.subr.mxu0 %v120
    %1234 = vmatpush1.msra.mxu0 %v119
    %1235 = vmatprep.subr.mxu0 %v141
    %1236 = vmatpush1.msra.mxu0 %v140
    %1237 = vmatprep.subr.mxu0 %v162
    %1238 = vmatpush1.msra.mxu0 %v161
    %1239 = vmatprep.subr.mxu0 %v183
    %1240 = vmatpush1.msra.mxu0 %v182
    %1241 = vmatprep.subr.mxu0 %v204
    %1242 = vmatpush1.msra.mxu0 %v203
    %1243 = vmatprep.subr.mxu0 %v225
    %1244 = vmatpush1.msra.mxu0 %v224
    %1245 = vmatprep.subr.mxu0 %v246
    %1246 = vmatpush1.msra.mxu0 %v245
    %1247 = vmatprep.subr.mxu0 %v267
    %1248 = vmatpush1.msra.mxu0 %v266
    %1249 = vmatprep.subr.mxu0 %v288
    %1250 = vmatpush1.msra.mxu0 %v287
    %1251 = vmatprep.subr.mxu0 %v309
    %1252 = vmatpush1.msra.mxu0 %v308
    %1253 = vmatprep.subr.mxu0 %v330
    %1254 = vmatpush1.msra.mxu0 %v329
    %1255 = vmatprep.subr.mxu0 %v351
    %1256 = vmatpush1.msra.mxu0 %v350
    %1257 = vmatprep.subr.mxu0 %v372
    %1258 = vmatpush1.msra.mxu0 %v371
    %1259 = vmatprep.subr.mxu0 %v393
    %1260 = vmatpush1.msra.mxu0 %v392
    %1261 = vmatprep.subr.mxu0 %v414
    %1262 = vmatpush1.msra.mxu0 %v413
    %1263 = vmatprep.subr.mxu0 %v435
    %1264 = vmatpush1.msra.mxu0 %v434
    %1265 = vmatprep.subr.mxu0 %v456
    %1266 = vmatpush1.msra.mxu0 %v455
    %1267 = vmatprep.subr.mxu0 %v477
    %1268 = vmatpush1.msra.mxu0 %v476
    %1269 = vmatprep.subr.mxu0 %v498
    %1270 = vmatpush1.msra.mxu0 %v497
    %1271 = vmatprep.subr.mxu0 %v519
    %1272 = vmatpush1.msra.mxu0 %v518
    %1273 = vmatprep.subr.mxu0 %v717
    %1274 = vmatpush1.msra.mxu0 %v714
    %1275 = vmatprep.subr.mxu0 0.0
    %1276 = vmatpush1.msra.mxu0 0.0
    %1277 = vmatprep.subr.mxu0 0.0
    %1278 = vmatpush1.msra.mxu0 0.0
    %1279 = vmatprep.subr.mxu0 0.0
    %1280 = vmatpush1.msra.mxu0 0.0
    %1281 = vmatprep.subr.mxu0 0.0
    %1282 = vmatpush1.msra.mxu0 0.0
    %1283 = vmatprep.subr.mxu0 0.0
    %1284 = vmatpush1.msra.mxu0 0.0
    %1285 = vmatprep.subr.mxu0 0.0
    %1286 = vmatpush1.msra.mxu0 0.0
    %1287 = vmatprep.subr.mxu0 0.0
    %1288 = vmatpush1.msra.mxu0 0.0
    %1289 = vmatprep.subr.mxu0 0.0
    %1290 = vmatpush1.msra.mxu0 0.0
    %1291 = vmatprep.subr.mxu0 0.0
    %1292 = vmatpush1.msra.mxu0 0.0
    %1293 = vmatprep.subr.mxu0 0.0
    %1294 = vmatpush1.msra.mxu0 0.0
    %1295 = vmatprep.mubr.f32.mxu0 %v668
    %1296 = vmatmul.mubr.f32.gmra.mrb[0].mxu0 %v664
    %v1297 = vpop.f32.mrb[0].mxu0
    %v1298 = vadd.f32 %v611, %v1297
    %v1299 = vpop.f32.mrb[0].mxu0
    %v1300 = vadd.f32 %v615, %v1299
    %1301 = vdwg.mxu0
    %1302 = vmatprep.subr.mxu0 %v101
    %1303 = vmatpush1.msra.mxu0 %v100
    %1304 = vmatprep.subr.mxu0 %v122
    %1305 = vmatpush1.msra.mxu0 %v121
    %1306 = vmatprep.subr.mxu0 %v143
    %1307 = vmatpush1.msra.mxu0 %v142
    %1308 = vmatprep.subr.mxu0 %v164
    %1309 = vmatpush1.msra.mxu0 %v163
    %1310 = vmatprep.subr.mxu0 %v185
    %1311 = vmatpush1.msra.mxu0 %v184
    %1312 = vmatprep.subr.mxu0 %v206
    %1313 = vmatpush1.msra.mxu0 %v205
    %1314 = vmatprep.subr.mxu0 %v227
    %1315 = vmatpush1.msra.mxu0 %v226
    %1316 = vmatprep.subr.mxu0 %v248
    %1317 = vmatpush1.msra.mxu0 %v247
    %1318 = vmatprep.subr.mxu0 %v269
    %1319 = vmatpush1.msra.mxu0 %v268
    %1320 = vmatprep.subr.mxu0 %v290
    %1321 = vmatpush1.msra.mxu0 %v289
    %1322 = vmatprep.subr.mxu0 %v311
    %1323 = vmatpush1.msra.mxu0 %v310
    %1324 = vmatprep.subr.mxu0 %v332
    %1325 = vmatpush1.msra.mxu0 %v331
    %1326 = vmatprep.subr.mxu0 %v353
    %1327 = vmatpush1.msra.mxu0 %v352
    %1328 = vmatprep.subr.mxu0 %v374
    %1329 = vmatpush1.msra.mxu0 %v373
    %1330 = vmatprep.subr.mxu0 %v395
    %1331 = vmatpush1.msra.mxu0 %v394
    %1332 = vmatprep.subr.mxu0 %v416
    %1333 = vmatpush1.msra.mxu0 %v415
    %1334 = vmatprep.subr.mxu0 %v437
    %1335 = vmatpush1.msra.mxu0 %v436
    %1336 = vmatprep.subr.mxu0 %v458
    %1337 = vmatpush1.msra.mxu0 %v457
    %1338 = vmatprep.subr.mxu0 %v479
    %1339 = vmatpush1.msra.mxu0 %v478
    %1340 = vmatprep.subr.mxu0 %v500
    %1341 = vmatpush1.msra.mxu0 %v499
    %1342 = vmatprep.subr.mxu0 %v521
    %1343 = vmatpush1.msra.mxu0 %v520
    %1344 = vmatprep.subr.mxu0 %v723
    %1345 = vmatpush1.msra.mxu0 %v720
    %1346 = vmatprep.subr.mxu0 0.0
    %1347 = vmatpush1.msra.mxu0 0.0
    %1348 = vmatprep.subr.mxu0 0.0
    %1349 = vmatpush1.msra.mxu0 0.0
    %1350 = vmatprep.subr.mxu0 0.0
    %1351 = vmatpush1.msra.mxu0 0.0
    %1352 = vmatprep.subr.mxu0 0.0
    %1353 = vmatpush1.msra.mxu0 0.0
    %1354 = vmatprep.subr.mxu0 0.0
    %1355 = vmatpush1.msra.mxu0 0.0
    %1356 = vmatprep.subr.mxu0 0.0
    %1357 = vmatpush1.msra.mxu0 0.0
    %1358 = vmatprep.subr.mxu0 0.0
    %1359 = vmatpush1.msra.mxu0 0.0
    %1360 = vmatprep.subr.mxu0 0.0
    %1361 = vmatpush1.msra.mxu0 0.0
    %1362 = vmatprep.subr.mxu0 0.0
    %1363 = vmatpush1.msra.mxu0 0.0
    %1364 = vmatprep.subr.mxu0 0.0
    %1365 = vmatpush1.msra.mxu0 0.0
    %1366 = vmatprep.mubr.f32.mxu0 %v668
    %1367 = vmatmul.mubr.f32.gmra.mrb[0].mxu0 %v664
    %v1368 = vpop.f32.mrb[0].mxu0
    %v1369 = vadd.f32 %v619, %v1368
    %v1370 = vpop.f32.mrb[0].mxu0
    %v1371 = vadd.f32 %v623, %v1370
    %1372 = vdwg.mxu0
    %1373 = vmatprep.subr.mxu0 %v103
    %1374 = vmatpush1.msra.mxu0 %v102
    %1375 = vmatprep.subr.mxu0 %v124
    %1376 = vmatpush1.msra.mxu0 %v123
    %1377 = vmatprep.subr.mxu0 %v145
    %1378 = vmatpush1.msra.mxu0 %v144
    %1379 = vmatprep.subr.mxu0 %v166
    %1380 = vmatpush1.msra.mxu0 %v165
    %1381 = vmatprep.subr.mxu0 %v187
    %1382 = vmatpush1.msra.mxu0 %v186
    %1383 = vmatprep.subr.mxu0 %v208
    %1384 = vmatpush1.msra.mxu0 %v207
    %1385 = vmatprep.subr.mxu0 %v229
    %1386 = vmatpush1.msra.mxu0 %v228
    %1387 = vmatprep.subr.mxu0 %v250
    %1388 = vmatpush1.msra.mxu0 %v249
    %1389 = vmatprep.subr.mxu0 %v271
    %1390 = vmatpush1.msra.mxu0 %v270
    %1391 = vmatprep.subr.mxu0 %v292
    %1392 = vmatpush1.msra.mxu0 %v291
    %1393 = vmatprep.subr.mxu0 %v313
    %1394 = vmatpush1.msra.mxu0 %v312
    %1395 = vmatprep.subr.mxu0 %v334
    %1396 = vmatpush1.msra.mxu0 %v333
    %1397 = vmatprep.subr.mxu0 %v355
    %1398 = vmatpush1.msra.mxu0 %v354
    %1399 = vmatprep.subr.mxu0 %v376
    %1400 = vmatpush1.msra.mxu0 %v375
    %1401 = vmatprep.subr.mxu0 %v397
    %1402 = vmatpush1.msra.mxu0 %v396
    %1403 = vmatprep.subr.mxu0 %v418
    %1404 = vmatpush1.msra.mxu0 %v417
    %1405 = vmatprep.subr.mxu0 %v439
    %1406 = vmatpush1.msra.mxu0 %v438
    %1407 = vmatprep.subr.mxu0 %v460
    %1408 = vmatpush1.msra.mxu0 %v459
    %1409 = vmatprep.subr.mxu0 %v481
    %1410 = vmatpush1.msra.mxu0 %v480
    %1411 = vmatprep.subr.mxu0 %v502
    %1412 = vmatpush1.msra.mxu0 %v501
    %1413 = vmatprep.subr.mxu0 %v523
    %1414 = vmatpush1.msra.mxu0 %v522
    %1415 = vmatprep.subr.mxu0 %v729
    %1416 = vmatpush1.msra.mxu0 %v726
    %1417 = vmatprep.subr.mxu0 0.0
    %1418 = vmatpush1.msra.mxu0 0.0
    %1419 = vmatprep.subr.mxu0 0.0
    %1420 = vmatpush1.msra.mxu0 0.0
    %1421 = vmatprep.subr.mxu0 0.0
    %1422 = vmatpush1.msra.mxu0 0.0
    %1423 = vmatprep.subr.mxu0 0.0
    %1424 = vmatpush1.msra.mxu0 0.0
    %1425 = vmatprep.subr.mxu0 0.0
    %1426 = vmatpush1.msra.mxu0 0.0
    %1427 = vmatprep.subr.mxu0 0.0
    %1428 = vmatpush1.msra.mxu0 0.0
    %1429 = vmatprep.subr.mxu0 0.0
    %1430 = vmatpush1.msra.mxu0 0.0
    %1431 = vmatprep.subr.mxu0 0.0
    %1432 = vmatpush1.msra.mxu0 0.0
    %1433 = vmatprep.subr.mxu0 0.0
    %1434 = vmatpush1.msra.mxu0 0.0
    %1435 = vmatprep.subr.mxu0 0.0
    %1436 = vmatpush1.msra.mxu0 0.0
    %1437 = vmatprep.mubr.f32.mxu0 %v668
    %1438 = vmatmul.mubr.f32.gmra.mrb[0].mxu0 %v664
    %v1439 = vpop.f32.mrb[0].mxu0
    %v1440 = vadd.f32 %v627, %v1439
    %v1441 = vpop.f32.mrb[0].mxu0
    %v1442 = vadd.f32 %v631, %v1441
    %1443 = vdwg.mxu0
    %1444 = vmatprep.subr.mxu0 0.0
    %1445 = vmatpush1.msra.mxu0 %v104
    %1446 = vmatprep.subr.mxu0 0.0
    %1447 = vmatpush1.msra.mxu0 %v125
    %1448 = vmatprep.subr.mxu0 0.0
    %1449 = vmatpush1.msra.mxu0 %v146
    %1450 = vmatprep.subr.mxu0 0.0
    %1451 = vmatpush1.msra.mxu0 %v167
    %1452 = vmatprep.subr.mxu0 0.0
    %1453 = vmatpush1.msra.mxu0 %v188
    %1454 = vmatprep.subr.mxu0 0.0
    %1455 = vmatpush1.msra.mxu0 %v209
    %1456 = vmatprep.subr.mxu0 0.0
    %1457 = vmatpush1.msra.mxu0 %v230
    %1458 = vmatprep.subr.mxu0 0.0
    %1459 = vmatpush1.msra.mxu0 %v251
    %1460 = vmatprep.subr.mxu0 0.0
    %1461 = vmatpush1.msra.mxu0 %v272
    %1462 = vmatprep.subr.mxu0 0.0
    %1463 = vmatpush1.msra.mxu0 %v293
    %1464 = vmatprep.subr.mxu0 0.0
    %1465 = vmatpush1.msra.mxu0 %v314
    %1466 = vmatprep.subr.mxu0 0.0
    %1467 = vmatpush1.msra.mxu0 %v335
    %1468 = vmatprep.subr.mxu0 0.0
    %1469 = vmatpush1.msra.mxu0 %v356
    %1470 = vmatprep.subr.mxu0 0.0
    %1471 = vmatpush1.msra.mxu0 %v377
    %1472 = vmatprep.subr.mxu0 0.0
    %1473 = vmatpush1.msra.mxu0 %v398
    %1474 = vmatprep.subr.mxu0 0.0
    %1475 = vmatpush1.msra.mxu0 %v419
    %1476 = vmatprep.subr.mxu0 0.0
    %1477 = vmatpush1.msra.mxu0 %v440
    %1478 = vmatprep.subr.mxu0 0.0
    %1479 = vmatpush1.msra.mxu0 %v461
    %1480 = vmatprep.subr.mxu0 0.0
    %1481 = vmatpush1.msra.mxu0 %v482
    %1482 = vmatprep.subr.mxu0 0.0
    %1483 = vmatpush1.msra.mxu0 %v503
    %1484 = vmatprep.subr.mxu0 0.0
    %1485 = vmatpush1.msra.mxu0 %v524
    %1486 = vmatprep.subr.mxu0 0.0
    %1487 = vmatpush1.msra.mxu0 %v732
    %1488 = vmatprep.subr.mxu0 0.0
    %1489 = vmatpush1.msra.mxu0 0.0
    %1490 = vmatprep.subr.mxu0 0.0
    %1491 = vmatpush1.msra.mxu0 0.0
    %1492 = vmatprep.subr.mxu0 0.0
    %1493 = vmatpush1.msra.mxu0 0.0
    %1494 = vmatprep.subr.mxu0 0.0
    %1495 = vmatpush1.msra.mxu0 0.0
    %1496 = vmatprep.subr.mxu0 0.0
    %1497 = vmatpush1.msra.mxu0 0.0
    %1498 = vmatprep.subr.mxu0 0.0
    %1499 = vmatpush1.msra.mxu0 0.0
    %1500 = vmatprep.subr.mxu0 0.0
    %1501 = vmatpush1.msra.mxu0 0.0
    %1502 = vmatprep.subr.mxu0 0.0
    %1503 = vmatpush1.msra.mxu0 0.0
    %1504 = vmatprep.subr.mxu0 0.0
    %1505 = vmatpush1.msra.mxu0 0.0
    %1506 = vmatprep.subr.mxu0 0.0
    %1507 = vmatpush1.msra.mxu0 0.0
    %1508 = vmatprep.mubr.f32.mxu0 %v668
    %1509 = vmatmul.mubr.f32.gmra.mrb[0].mxu0 %v664
    %v1510 = vpop.f32.mrb[0].mxu0
    %v1511 = vadd.f32 %v635, %v1510
    %v1512 = vpop.f32.mrb[0].mxu0
    %1513 = vdwg.mxu0
    %v1514 = vxor.u32 %v801, 2147483648
    %v1515 = vxor.u32 %v803, 2147483648
    %v1516 = vxor.u32 %v872, 2147483648
    %v1517 = vxor.u32 %v874, 2147483648
    %v1518 = vxor.u32 %v943, 2147483648
    %v1519 = vxor.u32 %v945, 2147483648
    %v1520 = vxor.u32 %v1014, 2147483648
    %v1521 = vmul.f32 %v1514, 1.442695
    %v1522 = vpow.pop %v1521
    %v1523 = vmul.f32 %v1515, 1.442695
    %v1524 = vpow.pop %v1523
    %v1525 = vmul.f32 %v1516, 1.442695
    %v1526 = vpow.pop %v1525
    %v1527 = vmul.f32 %v1517, 1.442695
    %v1528 = vpow.pop %v1527
    %v1529 = vmul.f32 %v1518, 1.442695
    %v1530 = vpow.pop %v1529
    %v1531 = vmul.f32 %v1519, 1.442695
    %v1532 = vpow.pop %v1531
    %v1533 = vmul.f32 %v1520, 1.442695
    %v1534 = vpow.pop %v1533
    %v1535 = vadd.f32 %v1522, 1.0
    %v1536 = vadd.f32 %v1524, 1.0
    %v1537 = vadd.f32 %v1526, 1.0
    %v1538 = vadd.f32 %v1528, 1.0
    %v1539 = vadd.f32 %v1530, 1.0
    %v1540 = vadd.f32 %v1532, 1.0
    %v1541 = vadd.f32 %v1534, 1.0
    %v1542 = vrcp.pop %v1535
    %v1543 = vmul.f32 1.0, %v1542
    %v1544 = vrcp.pop %v1536
    %v1545 = vmul.f32 1.0, %v1544
    %v1546 = vrcp.pop %v1537
    %v1547 = vmul.f32 1.0, %v1546
    %v1548 = vrcp.pop %v1538
    %v1549 = vmul.f32 1.0, %v1548
    %v1550 = vrcp.pop %v1539
    %v1551 = vmul.f32 1.0, %v1550
    %v1552 = vrcp.pop %v1540
    %v1553 = vmul.f32 1.0, %v1552
    %v1554 = vrcp.pop %v1541
    %v1555 = vmul.f32 1.0, %v1554
    %v1556 = vtanh.pop %v1016
    %v1557 = vtanh.pop %v1085
    %v1558 = vtanh.pop %v1087
    %v1559 = vtanh.pop %v1156
    %v1560 = vtanh.pop %v1158
    %v1561 = vtanh.pop %v1227
    %v1562 = vtanh.pop %v1229
    %v1563 = vxor.u32 %v1298, 2147483648
    %v1564 = vxor.u32 %v1300, 2147483648
    %v1565 = vxor.u32 %v1369, 2147483648
    %v1566 = vxor.u32 %v1371, 2147483648
    %v1567 = vxor.u32 %v1440, 2147483648
    %v1568 = vxor.u32 %v1442, 2147483648
    %v1569 = vxor.u32 %v1511, 2147483648
    %v1570 = vmul.f32 %v1563, 1.442695
    %v1571 = vpow.pop %v1570
    %v1572 = vmul.f32 %v1564, 1.442695
    %v1573 = vpow.pop %v1572
    %v1574 = vmul.f32 %v1565, 1.442695
    %v1575 = vpow.pop %v1574
    %v1576 = vmul.f32 %v1566, 1.442695
    %v1577 = vpow.pop %v1576
    %v1578 = vmul.f32 %v1567, 1.442695
    %v1579 = vpow.pop %v1578
    %v1580 = vmul.f32 %v1568, 1.442695
    %v1581 = vpow.pop %v1580
    %v1582 = vmul.f32 %v1569, 1.442695
    %v1583 = vpow.pop %v1582
    %v1584 = vadd.f32 %v1571, 1.0
    %v1585 = vadd.f32 %v1573, 1.0
    %v1586 = vadd.f32 %v1575, 1.0
    %v1587 = vadd.f32 %v1577, 1.0
    %v1588 = vadd.f32 %v1579, 1.0
    %v1589 = vadd.f32 %v1581, 1.0
    %v1590 = vadd.f32 %v1583, 1.0
    %v1591 = vrcp.pop %v1584
    %v1592 = vmul.f32 1.0, %v1591
    %v1593 = vrcp.pop %v1585
    %v1594 = vmul.f32 1.0, %v1593
    %v1595 = vrcp.pop %v1586
    %v1596 = vmul.f32 1.0, %v1595
    %v1597 = vrcp.pop %v1587
    %v1598 = vmul.f32 1.0, %v1597
    %v1599 = vrcp.pop %v1588
    %v1600 = vmul.f32 1.0, %v1599
    %v1601 = vrcp.pop %v1589
    %v1602 = vmul.f32 1.0, %v1601
    %v1603 = vrcp.pop %v1590
    %v1604 = vmul.f32 1.0, %v1603
    %v1605 = vmul.f32 %v1543, %v1556
    %v1606 = vmul.f32 %v1545, %v1557
    %v1607 = vmul.f32 %v1547, %v1558
    %v1608 = vmul.f32 %v1549, %v1559
    %v1609 = vmul.f32 %v1551, %v1560
    %v1610 = vmul.f32 %v1553, %v1561
    %v1611 = vmul.f32 %v1555, %v1562
    %v1612 = vtanh.pop %v1605
    %v1613 = vtanh.pop %v1606
    %v1614 = vtanh.pop %v1607
    %v1615 = vtanh.pop %v1608
    %v1616 = vtanh.pop %v1609
    %v1617 = vtanh.pop %v1610
    %v1618 = vtanh.pop %v1611
    %v1619 = vmul.f32 %v1592, %v1612
    %v1620 = vmul.f32 %v1594, %v1613
    %v1621 = vmul.f32 %v1596, %v1614
    %v1622 = vmul.f32 %v1598, %v1615
    %v1623 = vmul.f32 %v1600, %v1616
    %v1624 = vmul.f32 %v1602, %v1617
    %v1625 = vmul.f32 %v1604, %v1618
    %v1626 = vld [vmem:[#allocation8] sm:$0xff]
    %v1627 = vld [vmem:[#allocation8 + $0x8] sm:$0xff]
    %v1628 = vld [vmem:[#allocation8 + $0x10] sm:$0xff]
    %v1629 = vld [vmem:[#allocation8 + $0x18] sm:$0xff]
    %v1630 = vld [vmem:[#allocation8 + $0x20] sm:$0xff]
    %v1631 = vld [vmem:[#allocation8 + $0x28] sm:$0xff]
    %v1632 = vld [vmem:[#allocation8 + $0x30] sm:$0xff]
    %v1633 = vld [vmem:[#allocation8 + $0x38] sm:$0xff]
    %v1634 = vld [vmem:[#allocation8 + $0x40] sm:$0xff]
    %v1635 = vld [vmem:[#allocation8 + $0x48] sm:$0xff]
    %v1636 = vld [vmem:[#allocation8 + $0x50] sm:$0xff]
    %v1637 = vld [vmem:[#allocation8 + $0x58] sm:$0xff]
    %v1638 = vld [vmem:[#allocation8 + $0x60] sm:$0xff]
    %v1639 = vld [vmem:[#allocation8 + $0x68] sm:$0xff]
    %v1640 = vld [vmem:[#allocation8 + $0x70] sm:$0xff]
    %v1641 = vld [vmem:[#allocation8 + $0x78] sm:$0xff]
    %v1642 = vld [vmem:[#allocation8 + $0x80] sm:$0xff]
    %v1643 = vld [vmem:[#allocation8 + $0x88] sm:$0xff]
    %v1644 = vld [vmem:[#allocation8 + $0x90] sm:$0xff]
    %v1645 = vld [vmem:[#allocation8 + $0x98] sm:$0xff]
    %v1646 = vld [vmem:[#allocation8 + $0xa0] sm:$0xff]
    %v1647 = vld [vmem:[#allocation8 + $0xa8] sm:$0xff]
    %v1648 = vld [vmem:[#allocation8 + $0xb0] sm:$0xff]
    %v1649 = vld [vmem:[#allocation8 + $0xb8] sm:$0xff]
    %v1650 = vld [vmem:[#allocation8 + $0xc0] sm:$0xff]
    %v1651 = vld [vmem:[#allocation8 + $0xc8] sm:$0xff]
    %v1652 = vld [vmem:[#allocation8 + $0xd0] sm:$0xff]
    %v1653 = vld [vmem:[#allocation8 + $0xd8] sm:$0xff]
    %v1654 = vld [vmem:[#allocation8 + $0xe0] sm:$0xff]
    %v1655 = vld [vmem:[#allocation8 + $0xe8] sm:$0xff]
    %v1656 = vld [vmem:[#allocation8 + $0xf0] sm:$0xff]
    %v1657 = vld [vmem:[#allocation8 + $0xf8] sm:$0xff]
    %v1658 = vld [vmem:[#allocation8 + $0x100] sm:$0xff]
    %v1659 = vld [vmem:[#allocation8 + $0x108] sm:$0xff]
    %v1660 = vld [vmem:[#allocation8 + $0x110] sm:$0xff]
    %v1661 = vld [vmem:[#allocation8 + $0x118] sm:$0xff]
    %v1662 = vld [vmem:[#allocation8 + $0x120] sm:$0xff]
    %v1663 = vld [vmem:[#allocation8 + $0x128] sm:$0xff]
    %v1664 = vld [vmem:[#allocation8 + $0x130] sm:$0xff]
    %v1665 = vld [vmem:[#allocation8 + $0x138] sm:$0xff]
    %v1666 = vld [vmem:[#allocation8 + $0x140] sm:$0xff]
    %v1667 = vld [vmem:[#allocation8 + $0x148] sm:$0xff]
    %v1668 = vld [vmem:[#allocation8 + $0x150] sm:$0xff]
    %v1669 = vld [vmem:[#allocation8 + $0x158] sm:$0xff]
    %v1670 = vld [vmem:[#allocation8 + $0x160] sm:$0xff]
    %v1671 = vld [vmem:[#allocation8 + $0x168] sm:$0xff]
    %v1672 = vld [vmem:[#allocation8 + $0x170] sm:$0xff]
    %v1673 = vld [vmem:[#allocation8 + $0x178] sm:$0xff]
    %v1674 = vld [vmem:[#allocation8 + $0x180] sm:$0xff]
    %v1675 = vld [vmem:[#allocation8 + $0x188] sm:$0xff]
    %v1676 = vld [vmem:[#allocation8 + $0x190] sm:$0xff]
    %v1677 = vld [vmem:[#allocation8 + $0x198] sm:$0xff]
    %v1678 = vld [vmem:[#allocation8 + $0x1a0] sm:$0xff]
    %v1679 = vld [vmem:[#allocation8 + $0x1a8] sm:$0xff]
    %v1680 = vld [vmem:[#allocation8 + $0x1b0] sm:$0xff]
    %v1681 = vld [vmem:[#allocation8 + $0x1b8] sm:$0xff]
    %v1682 = vld [vmem:[#allocation8 + $0x1c0] sm:$0xff]
    %v1683 = vld [vmem:[#allocation8 + $0x1c8] sm:$0xff]
    %v1684 = vld [vmem:[#allocation8 + $0x1d0] sm:$0xff]
    %v1685 = vld [vmem:[#allocation8 + $0x1d8] sm:$0xff]
    %v1686 = vld [vmem:[#allocation8 + $0x1e0] sm:$0xff]
    %v1687 = vld [vmem:[#allocation8 + $0x1e8] sm:$0xff]
    %v1688 = vld [vmem:[#allocation8 + $0x1f0] sm:$0xff]
    %v1689 = vld [vmem:[#allocation8 + $0x1f8] sm:$0xff]
    %v1690 = vld [vmem:[#allocation8 + $0x200] sm:$0xff]
    %v1691 = vld [vmem:[#allocation8 + $0x208] sm:$0xff]
    %v1692 = vld [vmem:[#allocation8 + $0x210] sm:$0xff]
    %v1693 = vld [vmem:[#allocation8 + $0x218] sm:$0xff]
    %v1694 = vld [vmem:[#allocation8 + $0x220] sm:$0xff]
    %v1695 = vld [vmem:[#allocation8 + $0x228] sm:$0xff]
    %v1696 = vld [vmem:[#allocation8 + $0x230] sm:$0xff]
    %v1697 = vld [vmem:[#allocation8 + $0x238] sm:$0xff]
    %v1698 = vld [vmem:[#allocation8 + $0x240] sm:$0xff]
    %v1699 = vld [vmem:[#allocation8 + $0x248] sm:$0xff]
    %v1700 = vld [vmem:[#allocation8 + $0x250] sm:$0xff]
    %v1701 = vld [vmem:[#allocation8 + $0x258] sm:$0xff]
    %v1702 = vld [vmem:[#allocation8 + $0x260] sm:$0xff]
    %v1703 = vld [vmem:[#allocation8 + $0x268] sm:$0xff]
    %v1704 = vld [vmem:[#allocation8 + $0x270] sm:$0xff]
    %v1705 = vld [vmem:[#allocation8 + $0x278] sm:$0xff]
    %v1706 = vld [vmem:[#allocation8 + $0x280] sm:$0xff]
    %v1707 = vld [vmem:[#allocation8 + $0x288] sm:$0xff]
    %v1708 = vld [vmem:[#allocation8 + $0x290] sm:$0xff]
    %v1709 = vld [vmem:[#allocation8 + $0x298] sm:$0xff]
    %v1710 = vld [vmem:[#allocation8 + $0x2a0] sm:$0xff]
    %v1711 = vld [vmem:[#allocation8 + $0x2a8] sm:$0xff]
    %v1712 = vld [vmem:[#allocation8 + $0x2b0] sm:$0xff]
    %v1713 = vld [vmem:[#allocation8 + $0x2b8] sm:$0xff]
    %v1714 = vld [vmem:[#allocation8 + $0x2c0] sm:$0xff]
    %v1715 = vld [vmem:[#allocation8 + $0x2c8] sm:$0xff]
    %v1716 = vld [vmem:[#allocation8 + $0x2d0] sm:$0xff]
    %v1717 = vld [vmem:[#allocation8 + $0x2d8] sm:$0xff]
    %v1718 = vld [vmem:[#allocation8 + $0x2e0] sm:$0xff]
    %v1719 = vld [vmem:[#allocation8 + $0x2e8] sm:$0xff]
    %v1720 = vld [vmem:[#allocation8 + $0x2f0] sm:$0xff]
    %v1721 = vld [vmem:[#allocation8 + $0x2f8] sm:$0xff]
    %v1722 = vld [vmem:[#allocation8 + $0x300] sm:$0xff]
    %v1723 = vld [vmem:[#allocation8 + $0x308] sm:$0xff]
    %v1724 = vld [vmem:[#allocation8 + $0x310] sm:$0xff]
    %v1725 = vld [vmem:[#allocation8 + $0x318] sm:$0xff]
    %v1726 = vld [vmem:[#allocation8 + $0x320] sm:$0xff]
    %v1727 = vld [vmem:[#allocation8 + $0x328] sm:$0xff]
    %v1728 = vld [vmem:[#allocation8 + $0x330] sm:$0xff]
    %v1729 = vld [vmem:[#allocation8 + $0x338] sm:$0xff]
    %v1730 = vld [vmem:[#allocation8 + $0x340] sm:$0xff]
    %v1731 = vld [vmem:[#allocation8 + $0x348] sm:$0xff]
    %v1732 = vld [vmem:[#allocation8 + $0x350] sm:$0xff]
    %v1733 = vld [vmem:[#allocation8 + $0x358] sm:$0xff]
    %v1734 = vld [vmem:[#allocation8 + $0x360] sm:$0xff]
    %v1735 = vld [vmem:[#allocation8 + $0x368] sm:$0xff]
    %v1736 = vld [vmem:[#allocation8 + $0x370] sm:$0xff]
    %v1737 = vld [vmem:[#allocation8 + $0x378] sm:$0xff]
    %v1738 = vld [vmem:[#allocation10] sm:$0x1]
    %v1740 = vlaneseq
    %v1741 = vshrl.u32 %v1740, 7
    %v1742 = vsub.s32 0, %v1741
    %v1743 = vrot.slane %v1738, %v1742
    %1745 = vmatprep.subr.mxu0 0.0
    %1746 = vmatpush1.msra.mxu0 %v1626
    %1747 = vmatprep.subr.mxu0 0.0
    %1748 = vmatpush1.msra.mxu0 %v1627
    %1749 = vmatprep.subr.mxu0 0.0
    %1750 = vmatpush1.msra.mxu0 %v1628
    %1751 = vmatprep.subr.mxu0 0.0
    %1752 = vmatpush1.msra.mxu0 %v1629
    %1753 = vmatprep.subr.mxu0 0.0
    %1754 = vmatpush1.msra.mxu0 %v1630
    %1755 = vmatprep.subr.mxu0 0.0
    %1756 = vmatpush1.msra.mxu0 %v1631
    %1757 = vmatprep.subr.mxu0 0.0
    %1758 = vmatpush1.msra.mxu0 %v1632
    %1759 = vmatprep.subr.mxu0 0.0
    %1760 = vmatpush1.msra.mxu0 %v1633
    %1761 = vmatprep.subr.mxu0 0.0
    %1762 = vmatpush1.msra.mxu0 %v1634
    %1763 = vmatprep.subr.mxu0 0.0
    %1764 = vmatpush1.msra.mxu0 %v1635
    %1765 = vmatprep.subr.mxu0 0.0
    %1766 = vmatpush1.msra.mxu0 %v1636
    %1767 = vmatprep.subr.mxu0 0.0
    %1768 = vmatpush1.msra.mxu0 %v1637
    %1769 = vmatprep.subr.mxu0 0.0
    %1770 = vmatpush1.msra.mxu0 %v1638
    %1771 = vmatprep.subr.mxu0 0.0
    %1772 = vmatpush1.msra.mxu0 %v1639
    %1773 = vmatprep.subr.mxu0 0.0
    %1774 = vmatpush1.msra.mxu0 %v1640
    %1775 = vmatprep.subr.mxu0 0.0
    %1776 = vmatpush1.msra.mxu0 %v1641
    %1777 = vmatprep.subr.mxu0 0.0
    %1778 = vmatpush1.msra.mxu0 %v1642
    %1779 = vmatprep.subr.mxu0 0.0
    %1780 = vmatpush1.msra.mxu0 %v1643
    %1781 = vmatprep.subr.mxu0 0.0
    %1782 = vmatpush1.msra.mxu0 %v1644
    %1783 = vmatprep.subr.mxu0 0.0
    %1784 = vmatpush1.msra.mxu0 %v1645
    %1785 = vmatprep.subr.mxu0 0.0
    %1786 = vmatpush1.msra.mxu0 %v1646
    %1787 = vmatprep.subr.mxu0 0.0
    %1788 = vmatpush1.msra.mxu0 %v1647
    %1789 = vmatprep.subr.mxu0 0.0
    %1790 = vmatpush1.msra.mxu0 %v1648
    %1791 = vmatprep.subr.mxu0 0.0
    %1792 = vmatpush1.msra.mxu0 %v1649
    %1793 = vmatprep.subr.mxu0 0.0
    %1794 = vmatpush1.msra.mxu0 %v1650
    %1795 = vmatprep.subr.mxu0 0.0
    %1796 = vmatpush1.msra.mxu0 %v1651
    %1797 = vmatprep.subr.mxu0 0.0
    %1798 = vmatpush1.msra.mxu0 %v1652
    %1799 = vmatprep.subr.mxu0 0.0
    %1800 = vmatpush1.msra.mxu0 %v1653
    %1801 = vmatprep.subr.mxu0 0.0
    %1802 = vmatpush1.msra.mxu0 %v1654
    %1803 = vmatprep.subr.mxu0 0.0
    %1804 = vmatpush1.msra.mxu0 %v1655
    %1805 = vmatprep.subr.mxu0 0.0
    %1806 = vmatpush1.msra.mxu0 %v1656
    %1807 = vmatprep.subr.mxu0 0.0
    %1808 = vmatpush1.msra.mxu0 %v1657
    %1809 = vmatprep.mubr.f32.mxu0 %v1620
    %1810 = vmatmul.mubr.f32.gmra.mrb[0].mxu0 %v1619
    %v1811 = vpop.f32.mrb[0].mxu0
    %v1812 = vadd.f32 %v1743, %v1811
    %v1813 = vpop.f32.mrb[0].mxu0
    %1814 = vdwg.mxu0
    %1815 = vmatprep.subr.mxu0 0.0
    %1816 = vmatpush1.msra.mxu0 %v1658
    %1817 = vmatprep.subr.mxu0 0.0
    %1818 = vmatpush1.msra.mxu0 %v1659
    %1819 = vmatprep.subr.mxu0 0.0
    %1820 = vmatpush1.msra.mxu0 %v1660
    %1821 = vmatprep.subr.mxu0 0.0
    %1822 = vmatpush1.msra.mxu0 %v1661
    %1823 = vmatprep.subr.mxu0 0.0
    %1824 = vmatpush1.msra.mxu0 %v1662
    %1825 = vmatprep.subr.mxu0 0.0
    %1826 = vmatpush1.msra.mxu0 %v1663
    %1827 = vmatprep.subr.mxu0 0.0
    %1828 = vmatpush1.msra.mxu0 %v1664
    %1829 = vmatprep.subr.mxu0 0.0
    %1830 = vmatpush1.msra.mxu0 %v1665
    %1831 = vmatprep.subr.mxu0 0.0
    %1832 = vmatpush1.msra.mxu0 %v1666
    %1833 = vmatprep.subr.mxu0 0.0
    %1834 = vmatpush1.msra.mxu0 %v1667
    %1835 = vmatprep.subr.mxu0 0.0
    %1836 = vmatpush1.msra.mxu0 %v1668
    %1837 = vmatprep.subr.mxu0 0.0
    %1838 = vmatpush1.msra.mxu0 %v1669
    %1839 = vmatprep.subr.mxu0 0.0
    %1840 = vmatpush1.msra.mxu0 %v1670
    %1841 = vmatprep.subr.mxu0 0.0
    %1842 = vmatpush1.msra.mxu0 %v1671
    %1843 = vmatprep.subr.mxu0 0.0
    %1844 = vmatpush1.msra.mxu0 %v1672
    %1845 = vmatprep.subr.mxu0 0.0
    %1846 = vmatpush1.msra.mxu0 %v1673
    %1847 = vmatprep.subr.mxu0 0.0
    %1848 = vmatpush1.msra.mxu0 %v1674
    %1849 = vmatprep.subr.mxu0 0.0
    %1850 = vmatpush1.msra.mxu0 %v1675
    %1851 = vmatprep.subr.mxu0 0.0
    %1852 = vmatpush1.msra.mxu0 %v1676
    %1853 = vmatprep.subr.mxu0 0.0
    %1854 = vmatpush1.msra.mxu0 %v1677
    %1855 = vmatprep.subr.mxu0 0.0
    %1856 = vmatpush1.msra.mxu0 %v1678
    %1857 = vmatprep.subr.mxu0 0.0
    %1858 = vmatpush1.msra.mxu0 %v1679
    %1859 = vmatprep.subr.mxu0 0.0
    %1860 = vmatpush1.msra.mxu0 %v1680
    %1861 = vmatprep.subr.mxu0 0.0
    %1862 = vmatpush1.msra.mxu0 %v1681
    %1863 = vmatprep.subr.mxu0 0.0
    %1864 = vmatpush1.msra.mxu0 %v1682
    %1865 = vmatprep.subr.mxu0 0.0
    %1866 = vmatpush1.msra.mxu0 %v1683
    %1867 = vmatprep.subr.mxu0 0.0
    %1868 = vmatpush1.msra.mxu0 %v1684
    %1869 = vmatprep.subr.mxu0 0.0
    %1870 = vmatpush1.msra.mxu0 %v1685
    %1871 = vmatprep.subr.mxu0 0.0
    %1872 = vmatpush1.msra.mxu0 %v1686
    %1873 = vmatprep.subr.mxu0 0.0
    %1874 = vmatpush1.msra.mxu0 %v1687
    %1875 = vmatprep.subr.mxu0 0.0
    %1876 = vmatpush1.msra.mxu0 %v1688
    %1877 = vmatprep.subr.mxu0 0.0
    %1878 = vmatpush1.msra.mxu0 %v1689
    %1879 = vmatprep.mubr.f32.mxu0 %v1622
    %1880 = vmatmul.mubr.f32.gmra.mrb[0].mxu0 %v1621
    %v1881 = vpop.f32.mrb[0].mxu0
    %v1882 = vadd.f32 %v1812, %v1881
    %v1883 = vpop.f32.mrb[0].mxu0
    %1884 = vdwg.mxu0
    %1885 = vmatprep.subr.mxu0 0.0
    %1886 = vmatpush1.msra.mxu0 %v1690
    %1887 = vmatprep.subr.mxu0 0.0
    %1888 = vmatpush1.msra.mxu0 %v1691
    %1889 = vmatprep.subr.mxu0 0.0
    %1890 = vmatpush1.msra.mxu0 %v1692
    %1891 = vmatprep.subr.mxu0 0.0
    %1892 = vmatpush1.msra.mxu0 %v1693
    %1893 = vmatprep.subr.mxu0 0.0
    %1894 = vmatpush1.msra.mxu0 %v1694
    %1895 = vmatprep.subr.mxu0 0.0
    %1896 = vmatpush1.msra.mxu0 %v1695
    %1897 = vmatprep.subr.mxu0 0.0
    %1898 = vmatpush1.msra.mxu0 %v1696
    %1899 = vmatprep.subr.mxu0 0.0
    %1900 = vmatpush1.msra.mxu0 %v1697
    %1901 = vmatprep.subr.mxu0 0.0
    %1902 = vmatpush1.msra.mxu0 %v1698
    %1903 = vmatprep.subr.mxu0 0.0
    %1904 = vmatpush1.msra.mxu0 %v1699
    %1905 = vmatprep.subr.mxu0 0.0
    %1906 = vmatpush1.msra.mxu0 %v1700
    %1907 = vmatprep.subr.mxu0 0.0
    %1908 = vmatpush1.msra.mxu0 %v1701
    %1909 = vmatprep.subr.mxu0 0.0
    %1910 = vmatpush1.msra.mxu0 %v1702
    %1911 = vmatprep.subr.mxu0 0.0
    %1912 = vmatpush1.msra.mxu0 %v1703
    %1913 = vmatprep.subr.mxu0 0.0
    %1914 = vmatpush1.msra.mxu0 %v1704
    %1915 = vmatprep.subr.mxu0 0.0
    %1916 = vmatpush1.msra.mxu0 %v1705
    %1917 = vmatprep.subr.mxu0 0.0
    %1918 = vmatpush1.msra.mxu0 %v1706
    %1919 = vmatprep.subr.mxu0 0.0
    %1920 = vmatpush1.msra.mxu0 %v1707
    %1921 = vmatprep.subr.mxu0 0.0
    %1922 = vmatpush1.msra.mxu0 %v1708
    %1923 = vmatprep.subr.mxu0 0.0
    %1924 = vmatpush1.msra.mxu0 %v1709
    %1925 = vmatprep.subr.mxu0 0.0
    %1926 = vmatpush1.msra.mxu0 %v1710
    %1927 = vmatprep.subr.mxu0 0.0
    %1928 = vmatpush1.msra.mxu0 %v1711
    %1929 = vmatprep.subr.mxu0 0.0
    %1930 = vmatpush1.msra.mxu0 %v1712
    %1931 = vmatprep.subr.mxu0 0.0
    %1932 = vmatpush1.msra.mxu0 %v1713
    %1933 = vmatprep.subr.mxu0 0.0
    %1934 = vmatpush1.msra.mxu0 %v1714
    %1935 = vmatprep.subr.mxu0 0.0
    %1936 = vmatpush1.msra.mxu0 %v1715
    %1937 = vmatprep.subr.mxu0 0.0
    %1938 = vmatpush1.msra.mxu0 %v1716
    %1939 = vmatprep.subr.mxu0 0.0
    %1940 = vmatpush1.msra.mxu0 %v1717
    %1941 = vmatprep.subr.mxu0 0.0
    %1942 = vmatpush1.msra.mxu0 %v1718
    %1943 = vmatprep.subr.mxu0 0.0
    %1944 = vmatpush1.msra.mxu0 %v1719
    %1945 = vmatprep.subr.mxu0 0.0
    %1946 = vmatpush1.msra.mxu0 %v1720
    %1947 = vmatprep.subr.mxu0 0.0
    %1948 = vmatpush1.msra.mxu0 %v1721
    %1949 = vmatprep.mubr.f32.mxu0 %v1624
    %1950 = vmatmul.mubr.f32.gmra.mrb[0].mxu0 %v1623
    %v1951 = vpop.f32.mrb[0].mxu0
    %v1952 = vadd.f32 %v1882, %v1951
    %v1953 = vpop.f32.mrb[0].mxu0
    %1954 = vdwg.mxu0
    %1955 = vmatprep.subr.mxu0 0.0
    %1956 = vmatpush1.msra.mxu0 %v1722
    %1957 = vmatprep.subr.mxu0 0.0
    %1958 = vmatpush1.msra.mxu0 %v1723
    %1959 = vmatprep.subr.mxu0 0.0
    %1960 = vmatpush1.msra.mxu0 %v1724
    %1961 = vmatprep.subr.mxu0 0.0
    %1962 = vmatpush1.msra.mxu0 %v1725
    %1963 = vmatprep.subr.mxu0 0.0
    %1964 = vmatpush1.msra.mxu0 %v1726
    %1965 = vmatprep.subr.mxu0 0.0
    %1966 = vmatpush1.msra.mxu0 %v1727
    %1967 = vmatprep.subr.mxu0 0.0
    %1968 = vmatpush1.msra.mxu0 %v1728
    %1969 = vmatprep.subr.mxu0 0.0
    %1970 = vmatpush1.msra.mxu0 %v1729
    %1971 = vmatprep.subr.mxu0 0.0
    %1972 = vmatpush1.msra.mxu0 %v1730
    %1973 = vmatprep.subr.mxu0 0.0
    %1974 = vmatpush1.msra.mxu0 %v1731
    %1975 = vmatprep.subr.mxu0 0.0
    %1976 = vmatpush1.msra.mxu0 %v1732
    %1977 = vmatprep.subr.mxu0 0.0
    %1978 = vmatpush1.msra.mxu0 %v1733
    %1979 = vmatprep.subr.mxu0 0.0
    %1980 = vmatpush1.msra.mxu0 %v1734
    %1981 = vmatprep.subr.mxu0 0.0
    %1982 = vmatpush1.msra.mxu0 %v1735
    %1983 = vmatprep.subr.mxu0 0.0
    %1984 = vmatpush1.msra.mxu0 %v1736
    %1985 = vmatprep.subr.mxu0 0.0
    %1986 = vmatpush1.msra.mxu0 %v1737
    %1987 = vmatprep.subr.mxu0 0.0
    %1988 = vmatpush1.msra.mxu0 0.0
    %1989 = vmatprep.subr.mxu0 0.0
    %1990 = vmatpush1.msra.mxu0 0.0
    %1991 = vmatprep.subr.mxu0 0.0
    %1992 = vmatpush1.msra.mxu0 0.0
    %1993 = vmatprep.subr.mxu0 0.0
    %1994 = vmatpush1.msra.mxu0 0.0
    %1995 = vmatprep.subr.mxu0 0.0
    %1996 = vmatpush1.msra.mxu0 0.0
    %1997 = vmatprep.subr.mxu0 0.0
    %1998 = vmatpush1.msra.mxu0 0.0
    %1999 = vmatprep.subr.mxu0 0.0
    %2000 = vmatpush1.msra.mxu0 0.0
    %2001 = vmatprep.subr.mxu0 0.0
    %2002 = vmatpush1.msra.mxu0 0.0
    %2003 = vmatprep.subr.mxu0 0.0
    %2004 = vmatpush1.msra.mxu0 0.0
    %2005 = vmatprep.subr.mxu0 0.0
    %2006 = vmatpush1.msra.mxu0 0.0
    %2007 = vmatprep.subr.mxu0 0.0
    %2008 = vmatpush1.msra.mxu0 0.0
    %2009 = vmatprep.subr.mxu0 0.0
    %2010 = vmatpush1.msra.mxu0 0.0
    %2011 = vmatprep.subr.mxu0 0.0
    %2012 = vmatpush1.msra.mxu0 0.0
    %2013 = vmatprep.subr.mxu0 0.0
    %2014 = vmatpush1.msra.mxu0 0.0
    %2015 = vmatprep.subr.mxu0 0.0
    %2016 = vmatpush1.msra.mxu0 0.0
    %2017 = vmatprep.subr.mxu0 0.0
    %2018 = vmatpush1.msra.mxu0 0.0
    %2019 = vmatprep.mubr.f32.mxu0 0.0
    %2020 = vmatmul.mubr.f32.gmra.mrb[0].mxu0 %v1625
    %v2021 = vpop.f32.mrb[0].mxu0
    %v2022 = vadd.f32 %v1952, %v2021
    %v2023 = vpop.f32.mrb[0].mxu0
    %2024 = vdwg.mxu0
    %v2025 = vxor.u32 %v2022, 2147483648
    %v2026 = vmul.f32 %v2025, 1.442695
    %v2027 = vpow.pop %v2026
    %v2028 = vadd.f32 %v2027, 1.0
    %v2029 = vrcp.pop %v2028
    %v2030 = vmul.f32 1.0, %v2029
    %2031 = vst [vmem:[#allocation11] sm:$0x3] %v2030
    // Predicated region
    $region42: #{tpu_custom_call.1} parent=1 // pred_check
      _
    $region43: #{tpu_custom_call.1} parent=1 // pred_check_branch
      %2033 = sbr.rel (0) target = $region45
    $region44: #{tpu_custom_call.1} parent=1 // pred_region
      %s2035 = ssub.s32 32, 32
      %2036 = vsyncadd [#allocation4], %s2035
      %s2038 = sshll.u32 [#allocation11], 4
      %s2039 = int_to_ptr.vmem [resolvable:$true] %s2038
      %2041 = dma.vmem_to_hbm [thread:$0]  %s2039, 32, %s5, [#allocation4]
    $region45: #{tpu_custom_call.1} parent=1 // pred_fallthru
      _
    // Predicated region
    $region46: #{tpu_custom_call.1} parent=1 // pred_check
      _
    $region47: #{tpu_custom_call.1} parent=1 // pred_check_branch
      %2043 = sbr.rel (0) target = $region49
    $region48: #{tpu_custom_call.1} parent=1 // pred_region
      %2044 = dma.done [#allocation4], 32
    $region49: #{tpu_custom_call.1} parent=1 // pred_fallthru
      _
    %2045 = vsyncpa [#allocation3], 1
    %2046 = vsyncpa [#allocation6], 1
    %2047 = vsyncpa [#allocation9], 1
    %2048 = vsyncpa [#allocation4], 1

</llo_original>
